<compile_context>
chip_gen: v6e
topology: v6e:2x2x1
jax: 0.10.0
libtpu: 0.0.40
codegen_flags: <defaults>
</compile_context>

<pallas_src>
import functools

import jax
import jax.numpy as jnp
from jax.experimental import pallas as pl
from jax.experimental.pallas import tpu as pltpu


def _round_up(x, m):
    return (x + m - 1) // m * m


def _conv_bn_relu_kernel(a_lo_ref, a_hi_ref, w_ref, bias_ref, o_ref, *, shifts):
    """One (tm, tn) output tile of the flattened conv + BN + ReLU.

    a_lo_ref : (tm, Cp)        bf16  rows [i*tm, (i+1)*tm) of the flat padded input
    a_hi_ref : (tm, Cp)        bf16  rows [(i+1)*tm, (i+2)*tm)  (halo for the tap shifts)
    w_ref    : (KH*KW, Cp, tn) bf16  BN-scale-folded weights, one (Cp, tn) slice per tap
    bias_ref : (1, tn)         f32   folded BN bias
    o_ref    : (tm, tn)
    """
    tm = o_ref.shape[0]
    # Aligned concat (offset tm is a multiple of the sublane packing): rows
    # [i*tm, (i+2)*tm) of the flat input resident as one value.
    a = jnp.concatenate([a_lo_ref[...], a_hi_ref[...]], axis=0)
    acc = jnp.zeros(o_ref.shape, jnp.float32)
    for t, s in enumerate(shifts):                 # static tap loop (unrolled)
        x = a[s:s + tm, :]                         # rows shifted by tap offset
        acc = acc + jnp.dot(x, w_ref[t], preferred_element_type=jnp.float32)
    o_ref[...] = jnp.maximum(acc + bias_ref[...], 0.0).astype(o_ref.dtype)


def basic_conv2d(x, weight, gamma, beta, running_mean, running_var, *,
                 stride=1, padding=1, eps=1e-5, tm=256, tn=256,
                 out_dtype=jnp.float32):
    """x: (N, C, H, W) f32 NCHW.  weight: (OC, C, KH, KW).  Returns NCHW."""
    N, C, H, W = x.shape
    OC, _, KH, KW = weight.shape
    Hp, Wp = H + 2 * padding, W + 2 * padding
    OH1, OW1 = Hp - KH + 1, Wp - KW + 1            # stride-1 output extent

    # ---- glue: NCHW -> padded NHWC, one row per padded pixel ----
    xt = jnp.transpose(x, (0, 2, 3, 1))
    xpad = jnp.pad(xt, ((0, 0), (padding, padding), (padding, padding), (0, 0)))
    Mq = N * Hp * Wp
    a_flat = xpad.reshape(Mq, C).astype(jnp.bfloat16)

    # ---- fold BN (inference stats) into the weights / bias (in f32) ----
    scale = gamma / jnp.sqrt(running_var + eps)            # (OC,)
    bias = beta - running_mean * scale                     # (OC,)
    w_taps = (weight * scale[:, None, None, None]).transpose(2, 3, 1, 0)
    w_taps = w_taps.reshape(KH * KW, C, OC)                # (taps, C, OC)

    # ---- TPU-friendly padding (jnp.pad, no zeros+scatter) ----
    Cp = _round_up(max(C, 128), 128)                       # contraction dim (lanes)
    tn = min(tn, _round_up(OC, 128))
    if _round_up(OC, 128) % tn:
        tn = 128
    OCp = _round_up(OC, tn)
    max_shift = (KH - 1) * Wp + (KW - 1)
    tm = max(tm, _round_up(max_shift, 128))                # shifts must fit in one block
    num_m = -(-Mq // tm)

    a_pad = jnp.pad(a_flat, ((0, (num_m + 1) * tm - Mq), (0, Cp - C)))
    w_pad = jnp.pad(w_taps, ((0, 0), (0, Cp - C), (0, OCp - OC))).astype(jnp.bfloat16)
    b_pad = jnp.pad(bias, (0, OCp - OC)).reshape(1, OCp).astype(jnp.float32)

    shifts = tuple(kh * Wp + kw for kh in range(KH) for kw in range(KW))
    grid = (OCp // tn, num_m)     # OC tiles outer so the weight block stays resident

    out = pl.pallas_call(
        functools.partial(_conv_bn_relu_kernel, shifts=shifts),
        out_shape=jax.ShapeDtypeStruct((num_m * tm, OCp), out_dtype),
        grid_spec=pltpu.PrefetchScalarGridSpec(
            num_scalar_prefetch=0,
            grid=grid,
            in_specs=[
                pl.BlockSpec((tm, Cp), lambda j, i: (i, 0)),        # current rows
                pl.BlockSpec((tm, Cp), lambda j, i: (i + 1, 0)),    # halo rows
                pl.BlockSpec((KH * KW, Cp, tn), lambda j, i: (0, 0, j)),
                pl.BlockSpec((1, tn), lambda j, i: (0, j)),
            ],
            out_specs=pl.BlockSpec((tm, tn), lambda j, i: (i, j)),
        ),
        compiler_params=pltpu.CompilerParams(
            dimension_semantics=("parallel", "parallel"),
            vmem_limit_bytes=64 * 1024 * 1024),
    )(a_pad, a_pad, w_pad, b_pad)

    # ---- glue: drop padded rows/cols/channels, back to NCHW ----
    y = out[:Mq, :OC].reshape(N, Hp, Wp, OC)[:, :OH1, :OW1, :]
    if stride != 1:
        y = y[:, ::stride, ::stride, :]
    return jnp.transpose(y, (0, 3, 1, 2))


def _reference(x, weight, gamma, beta, running_mean, running_var, *,
               stride=1, padding=1, eps=1e-5):
    y = jax.lax.conv_general_dilated(
        x, weight, window_strides=(stride, stride),
        padding=[(padding, padding), (padding, padding)],
        dimension_numbers=("NCHW", "OIHW", "NCHW"))
    sc = (gamma / jnp.sqrt(running_var + eps)).reshape(1, -1, 1, 1)
    bi = (beta - running_mean * gamma / jnp.sqrt(running_var + eps)).reshape(1, -1, 1, 1)
    return jnp.maximum(y * sc + bi, 0.0)


if __name__ == "__main__":
    key = jax.random.PRNGKey(0)
    k1, k2, k3, k4, k5, k6 = jax.random.split(key, 6)

    N, C, H, W = 2, 4, 16, 16
    OC, KH, KW = 8, 3, 3

    x = jax.random.normal(k1, (N, C, H, W), jnp.float32)
    weight = jax.random.normal(k2, (OC, C, KH, KW), jnp.float32) * 0.1
    gamma = 1.0 + 0.1 * jax.random.normal(k3, (OC,), jnp.float32)
    beta = 0.1 * jax.random.normal(k4, (OC,), jnp.float32)
    running_mean = 0.1 * jax.random.normal(k5, (OC,), jnp.float32)
    running_var = 1.0 + 0.1 * jax.random.uniform(k6, (OC,), jnp.float32)

    fn = jax.jit(functools.partial(basic_conv2d, stride=1, padding=1, eps=1e-5))
    out = jax.block_until_ready(fn(x, weight, gamma, beta,
                                   running_mean, running_var))

    ref = _reference(x, weight, gamma, beta, running_mean, running_var,
                     stride=1, padding=1, eps=1e-5)
    assert out.shape == (N, OC, H, W), out.shape
    # bf16 matmul operands -> looser tolerance vs the f32 reference (expected).
    assert jnp.allclose(out, ref, atol=5e-2, rtol=5e-2), float(
        jnp.max(jnp.abs(out - ref)))
    print("KERNEL_OK")
</pallas_src>

<mosaic_0001>
module attributes {stable_mosaic.version = 11 : i64} {
  func.func @_conv_bn_relu_kernel(%arg0: i32, %arg1: i32, %arg2: memref<256x128xbf16, #tpu.memory_space<vmem>>, %arg3: memref<256x128xbf16, #tpu.memory_space<vmem>>, %arg4: memref<9x128x128xbf16, #tpu.memory_space<vmem>>, %arg5: memref<1x128xf32, #tpu.memory_space<vmem>>, %arg6: memref<256x128xf32, #tpu.memory_space<vmem>>) attributes {dimension_semantics = [#tpu.dimension_semantics<parallel>, #tpu.dimension_semantics<parallel>], iteration_bounds = array<i64: 1, 3>, scalar_prefetch = 0 : i64, scratch_operands = 0 : i64, tpu.core_type = #tpu.core_type<tc>, window_params = [{transform_indices = @transform_0, window_bounds = array<i64: 256, 128>}, {transform_indices = @transform_1, window_bounds = array<i64: 256, 128>}, {transform_indices = @transform_2, window_bounds = array<i64: 9, 128, 128>}, {transform_indices = @transform_3, window_bounds = array<i64: 1, 128>}, {transform_indices = @transform_4, window_bounds = array<i64: 256, 128>}]} {
    %c0 = arith.constant 0 : index
    %c0_0 = arith.constant 0 : index
    %0 = vector.load %arg2[%c0, %c0_0] : memref<256x128xbf16, #tpu.memory_space<vmem>>, vector<256x128xbf16>
    %c0_1 = arith.constant 0 : index
    %c0_2 = arith.constant 0 : index
    %1 = vector.load %arg3[%c0_1, %c0_2] : memref<256x128xbf16, #tpu.memory_space<vmem>>, vector<256x128xbf16>
    %2 = tpu.concatenate %0, %1 in 0 : vector<256x128xbf16>, vector<256x128xbf16> -> vector<512x128xbf16>
    %cst = arith.constant 0.000000e+00 : f32
    %3 = vector.broadcast %cst : f32 to vector<256x128xf32>
    %4 = vector.extract_strided_slice %2 {offsets = [0, 0], sizes = [256, 128], strides = [1, 1]} : vector<512x128xbf16> to vector<256x128xbf16>
    %c0_3 = arith.constant 0 : index
    %c0_4 = arith.constant 0 : index
    %c0_5 = arith.constant 0 : index
    %5 = vector.load %arg4[%c0_3, %c0_4, %c0_5] : memref<9x128x128xbf16, #tpu.memory_space<vmem>>, vector<1x128x128xbf16>
    %6 = vector.shape_cast %5 : vector<1x128x128xbf16> to vector<128x128xbf16>
    %cst_6 = arith.constant dense<0.000000e+00> : vector<256x128xf32>
    %7 = tpu.matmul %4, %6, %cst_6 {dimension_numbers = #tpu.dot_dimension_numbers<[1], [0], [0], [1], [0, 0, 1, 1], [], []>} : vector<256x128xbf16>, vector<128x128xbf16>, vector<256x128xf32> -> vector<256x128xf32>
    %8 = arith.addf %3, %7 : vector<256x128xf32>
    %9 = vector.extract_strided_slice %2 {offsets = [1, 0], sizes = [256, 128], strides = [1, 1]} : vector<512x128xbf16> to vector<256x128xbf16>
    %c1 = arith.constant 1 : index
    %c0_7 = arith.constant 0 : index
    %c0_8 = arith.constant 0 : index
    %10 = vector.load %arg4[%c1, %c0_7, %c0_8] : memref<9x128x128xbf16, #tpu.memory_space<vmem>>, vector<1x128x128xbf16>
    %11 = vector.shape_cast %10 : vector<1x128x128xbf16> to vector<128x128xbf16>
    %cst_9 = arith.constant dense<0.000000e+00> : vector<256x128xf32>
    %12 = tpu.matmul %9, %11, %cst_9 {dimension_numbers = #tpu.dot_dimension_numbers<[1], [0], [0], [1], [0, 0, 1, 1], [], []>} : vector<256x128xbf16>, vector<128x128xbf16>, vector<256x128xf32> -> vector<256x128xf32>
    %13 = arith.addf %8, %12 : vector<256x128xf32>
    %14 = vector.extract_strided_slice %2 {offsets = [2, 0], sizes = [256, 128], strides = [1, 1]} : vector<512x128xbf16> to vector<256x128xbf16>
    %c2 = arith.constant 2 : index
    %c0_10 = arith.constant 0 : index
    %c0_11 = arith.constant 0 : index
    %15 = vector.load %arg4[%c2, %c0_10, %c0_11] : memref<9x128x128xbf16, #tpu.memory_space<vmem>>, vector<1x128x128xbf16>
    %16 = vector.shape_cast %15 : vector<1x128x128xbf16> to vector<128x128xbf16>
    %cst_12 = arith.constant dense<0.000000e+00> : vector<256x128xf32>
    %17 = tpu.matmul %14, %16, %cst_12 {dimension_numbers = #tpu.dot_dimension_numbers<[1], [0], [0], [1], [0, 0, 1, 1], [], []>} : vector<256x128xbf16>, vector<128x128xbf16>, vector<256x128xf32> -> vector<256x128xf32>
    %18 = arith.addf %13, %17 : vector<256x128xf32>
    %19 = vector.extract_strided_slice %2 {offsets = [18, 0], sizes = [256, 128], strides = [1, 1]} : vector<512x128xbf16> to vector<256x128xbf16>
    %c3 = arith.constant 3 : index
    %c0_13 = arith.constant 0 : index
    %c0_14 = arith.constant 0 : index
    %20 = vector.load %arg4[%c3, %c0_13, %c0_14] : memref<9x128x128xbf16, #tpu.memory_space<vmem>>, vector<1x128x128xbf16>
    %21 = vector.shape_cast %20 : vector<1x128x128xbf16> to vector<128x128xbf16>
    %cst_15 = arith.constant dense<0.000000e+00> : vector<256x128xf32>
    %22 = tpu.matmul %19, %21, %cst_15 {dimension_numbers = #tpu.dot_dimension_numbers<[1], [0], [0], [1], [0, 0, 1, 1], [], []>} : vector<256x128xbf16>, vector<128x128xbf16>, vector<256x128xf32> -> vector<256x128xf32>
    %23 = arith.addf %18, %22 : vector<256x128xf32>
    %24 = vector.extract_strided_slice %2 {offsets = [19, 0], sizes = [256, 128], strides = [1, 1]} : vector<512x128xbf16> to vector<256x128xbf16>
    %c4 = arith.constant 4 : index
    %c0_16 = arith.constant 0 : index
    %c0_17 = arith.constant 0 : index
    %25 = vector.load %arg4[%c4, %c0_16, %c0_17] : memref<9x128x128xbf16, #tpu.memory_space<vmem>>, vector<1x128x128xbf16>
    %26 = vector.shape_cast %25 : vector<1x128x128xbf16> to vector<128x128xbf16>
    %cst_18 = arith.constant dense<0.000000e+00> : vector<256x128xf32>
    %27 = tpu.matmul %24, %26, %cst_18 {dimension_numbers = #tpu.dot_dimension_numbers<[1], [0], [0], [1], [0, 0, 1, 1], [], []>} : vector<256x128xbf16>, vector<128x128xbf16>, vector<256x128xf32> -> vector<256x128xf32>
    %28 = arith.addf %23, %27 : vector<256x128xf32>
    %29 = vector.extract_strided_slice %2 {offsets = [20, 0], sizes = [256, 128], strides = [1, 1]} : vector<512x128xbf16> to vector<256x128xbf16>
    %c5 = arith.constant 5 : index
    %c0_19 = arith.constant 0 : index
    %c0_20 = arith.constant 0 : index
    %30 = vector.load %arg4[%c5, %c0_19, %c0_20] : memref<9x128x128xbf16, #tpu.memory_space<vmem>>, vector<1x128x128xbf16>
    %31 = vector.shape_cast %30 : vector<1x128x128xbf16> to vector<128x128xbf16>
    %cst_21 = arith.constant dense<0.000000e+00> : vector<256x128xf32>
    %32 = tpu.matmul %29, %31, %cst_21 {dimension_numbers = #tpu.dot_dimension_numbers<[1], [0], [0], [1], [0, 0, 1, 1], [], []>} : vector<256x128xbf16>, vector<128x128xbf16>, vector<256x128xf32> -> vector<256x128xf32>
    %33 = arith.addf %28, %32 : vector<256x128xf32>
    %34 = vector.extract_strided_slice %2 {offsets = [36, 0], sizes = [256, 128], strides = [1, 1]} : vector<512x128xbf16> to vector<256x128xbf16>
    %c6 = arith.constant 6 : index
    %c0_22 = arith.constant 0 : index
    %c0_23 = arith.constant 0 : index
    %35 = vector.load %arg4[%c6, %c0_22, %c0_23] : memref<9x128x128xbf16, #tpu.memory_space<vmem>>, vector<1x128x128xbf16>
    %36 = vector.shape_cast %35 : vector<1x128x128xbf16> to vector<128x128xbf16>
    %cst_24 = arith.constant dense<0.000000e+00> : vector<256x128xf32>
    %37 = tpu.matmul %34, %36, %cst_24 {dimension_numbers = #tpu.dot_dimension_numbers<[1], [0], [0], [1], [0, 0, 1, 1], [], []>} : vector<256x128xbf16>, vector<128x128xbf16>, vector<256x128xf32> -> vector<256x128xf32>
    %38 = arith.addf %33, %37 : vector<256x128xf32>
    %39 = vector.extract_strided_slice %2 {offsets = [37, 0], sizes = [256, 128], strides = [1, 1]} : vector<512x128xbf16> to vector<256x128xbf16>
    %c7 = arith.constant 7 : index
    %c0_25 = arith.constant 0 : index
    %c0_26 = arith.constant 0 : index
    %40 = vector.load %arg4[%c7, %c0_25, %c0_26] : memref<9x128x128xbf16, #tpu.memory_space<vmem>>, vector<1x128x128xbf16>
    %41 = vector.shape_cast %40 : vector<1x128x128xbf16> to vector<128x128xbf16>
    %cst_27 = arith.constant dense<0.000000e+00> : vector<256x128xf32>
    %42 = tpu.matmul %39, %41, %cst_27 {dimension_numbers = #tpu.dot_dimension_numbers<[1], [0], [0], [1], [0, 0, 1, 1], [], []>} : vector<256x128xbf16>, vector<128x128xbf16>, vector<256x128xf32> -> vector<256x128xf32>
    %43 = arith.addf %38, %42 : vector<256x128xf32>
    %44 = vector.extract_strided_slice %2 {offsets = [38, 0], sizes = [256, 128], strides = [1, 1]} : vector<512x128xbf16> to vector<256x128xbf16>
    %c8 = arith.constant 8 : index
    %c0_28 = arith.constant 0 : index
    %c0_29 = arith.constant 0 : index
    %45 = vector.load %arg4[%c8, %c0_28, %c0_29] : memref<9x128x128xbf16, #tpu.memory_space<vmem>>, vector<1x128x128xbf16>
    %46 = vector.shape_cast %45 : vector<1x128x128xbf16> to vector<128x128xbf16>
    %cst_30 = arith.constant dense<0.000000e+00> : vector<256x128xf32>
    %47 = tpu.matmul %44, %46, %cst_30 {dimension_numbers = #tpu.dot_dimension_numbers<[1], [0], [0], [1], [0, 0, 1, 1], [], []>} : vector<256x128xbf16>, vector<128x128xbf16>, vector<256x128xf32> -> vector<256x128xf32>
    %48 = arith.addf %43, %47 : vector<256x128xf32>
    %c0_31 = arith.constant 0 : index
    %c0_32 = arith.constant 0 : index
    %49 = vector.load %arg5[%c0_31, %c0_32] : memref<1x128xf32, #tpu.memory_space<vmem>>, vector<1x128xf32>
    %50 = vector.broadcast %49 : vector<1x128xf32> to vector<256x128xf32>
    %51 = arith.addf %48, %50 : vector<256x128xf32>
    %cst_33 = arith.constant 0.000000e+00 : f32
    %52 = vector.broadcast %cst_33 : f32 to vector<256x128xf32>
    %53 = arith.maximumf %51, %52 : vector<256x128xf32>
    %c0_34 = arith.constant 0 : index
    %c0_35 = arith.constant 0 : index
    %54 = vector.load %arg6[%c0_34, %c0_35] : memref<256x128xf32, #tpu.memory_space<vmem>>, vector<256x128xf32>
    tpu.vector_store %arg6[%c0_34, %c0_35], %53 {strides = array<i32>} : memref<256x128xf32, #tpu.memory_space<vmem>>, vector<256x128xf32>,
    return
  }
  func.func @transform_0(%arg0: i32, %arg1: i32) -> (i32, i32) {
    %c0_i32 = arith.constant 0 : i32
    %c0_i32_0 = arith.constant 0 : i32
    return %arg1, %c0_i32 : i32, i32
  }
  func.func @transform_1(%arg0: i32, %arg1: i32) -> (i32, i32) {
    %c1_i32 = arith.constant 1 : i32
    %0 = arith.addi %arg1, %c1_i32 : i32
    %c0_i32 = arith.constant 0 : i32
    %c0_i32_0 = arith.constant 0 : i32
    return %0, %c0_i32 : i32, i32
  }
  func.func @transform_2(%arg0: i32, %arg1: i32) -> (i32, i32, i32) {
    %c0_i32 = arith.constant 0 : i32
    %c0_i32_0 = arith.constant 0 : i32
    %c0_i32_1 = arith.constant 0 : i32
    return %c0_i32, %c0_i32_0, %arg0 : i32, i32, i32
  }
  func.func @transform_3(%arg0: i32, %arg1: i32) -> (i32, i32) {
    %c0_i32 = arith.constant 0 : i32
    %c0_i32_0 = arith.constant 0 : i32
    return %c0_i32, %arg0 : i32, i32
  }
  func.func @transform_4(%arg0: i32, %arg1: i32) -> (i32, i32) {
    %c0_i32 = arith.constant 0 : i32
    return %arg1, %arg0 : i32, i32
  }
}

</mosaic_0001>

<llo_original>
// kernel: basic_conv2d.1
$region0: #{basic_conv2d.1}
  #allocation0 [shape = 'u32[]', space=smem, size = 0x4, offset = 0x4, fixed_abs, tag = 'smem constant byte address 0x4 - core index']
  #allocation1 [shape = 'u32[144,128]{1,0:T(1,128)}', space=vmem, size = 0x12000, scoped, tag = 'internal scratch']
  %s0 = inlined_call_operand.vmem [shape: bf16[1024,128], index: 0, kind: input, shape index: {}, may-alias: {0,1}]
  %s1 = inlined_call_operand.vmem [shape: bf16[1024,128], index: 1, kind: input, shape index: {}, may-alias: {0,1}]
  %s2 = inlined_call_operand.vmem [shape: bf16[9,128,128], index: 2, kind: input, shape index: {}]
  %s3 = inlined_call_operand.vmem [shape: f32[1,128], index: 3, kind: input, shape index: {}]
  %s4 = inlined_call_operand.vmem [shape: f32[768,128], index: 4, kind: output, shape index: {}]
  %s5 = sld [smem:[#allocation0]]
  $region49: #{basic_conv2d.1} parent=0
    _
  %s7 = ssub.s32 1, %s5
  %s8 = scalar_select 0, %s7, %s5
  loop: start=0, step=1, limit=5
  $region2: #{basic_conv2d.1} parent=0 // loop_pre_header
    _
  $region3: #{basic_conv2d.1} parent=0 // loop_header
    %s10 = sphi 0, %s14
    %p11 = scmp.ge.s32.totalorder %s10, 5
    %s17 = sphi 0, %s29
    %s18 = sphi 0, %s25
    %s19 = sphi 0, %s17
    %s20 = sphi 0, %s18
    %s21 = sphi 0, %s19
    %s22 = sphi 0, %s20
    %s32 = sphi 0, %s34
    %s35 = sphi 0, %s32
    %s36 = sphi 0, %s35
    %s52 = sphi 0, %s36
    %s60 = sphi 0, %s62
    %s63 = sphi 0, %s60
    %s64 = sphi 0, %s63
    %s80 = sphi 0, %s64
    %s86 = sphi 0, %s88
    %s89 = sphi 0, %s86
    %s90 = sphi 0, %s89
    %s106 = sphi 0, %s90
    %s112 = sphi 0, %s114
    %s115 = sphi 0, %s112
    %s116 = sphi 0, %s115
    %s132 = sphi 0, %s116
    %s140 = sphi 0, %s142
    %s143 = sphi 0, %s140
    %s144 = sphi 0, %s143
    %s160 = sphi 0, %s144
  $region4: #{basic_conv2d.1} parent=0 // loop_header_branch
    %13 = sbr.rel (%p11) target = $region8
  $region5: #{basic_conv2d.1} parent=0 // loop_body
    %s15 = ssub.s32 %s10, 1
    %s16 = ssub.s32 %s10, 2
    %s23 = sadd.s32 1, %s18
    %p24 = scmp.ge.s32.totalorder %s23, 3
    %s25 = scalar_select %p24, 0, %s23
    %s26 = sadd.s32 1, %s17
    %s27 = scalar_select %p24, %s26, %s17
    %p28 = scmp.ge.s32.totalorder %s27, 1
    %s29 = scalar_select %p28, 0, %s27
    %s30 = ssub.s32 %s18, %s25
    %p31 = scmp.eq.s32.totalorder %s30, 0
    %s33 = sadd.s32 %s32, 1
    %s34 = scalar_select %p31, %s32, %s33
    %p37 = pneg %p31
    %p38 = scmp.eq.s32.totalorder %s10, 2
    %p39 = por %p37, %p38
    %p40 = scmp.ne.s32.totalorder %s32, %s35
    %p41 = scmp.eq.s32.totalorder %s10, 0
    %p42 = por %p40, %p41
    %p43 = scmp.ne.s32.totalorder %s32, %s35
    %p44 = scmp.eq.s32.totalorder %s15, 2
    %p45 = por %p43, %p44
    %p46 = scmp.ne.s32.totalorder %s35, %s36
    %p47 = scmp.eq.s32.totalorder %s15, 0
    %p48 = por %p46, %p47
    %p49 = scmp.ne.s32.totalorder %s35, %s36
    %p50 = scmp.eq.s32.totalorder %s16, 2
    %p51 = por %p49, %p50
    %p53 = scmp.ne.s32.totalorder %s36, %s52
    %p54 = scmp.eq.s32.totalorder %s16, 0
    %p55 = por %p53, %p54
    %s56 = sadd.s32 %s18, 1
    %s57 = sadd.s32 %s25, 1
    %s58 = ssub.s32 %s56, %s57
    %p59 = scmp.eq.s32.totalorder %s58, 0
    %s61 = sadd.s32 %s60, 1
    %s62 = scalar_select %p59, %s60, %s61
    %p65 = pneg %p59
    %p66 = scmp.eq.s32.totalorder %s10, 2
    %p67 = por %p65, %p66
    %p68 = scmp.ne.s32.totalorder %s60, %s63
    %p69 = scmp.eq.s32.totalorder %s10, 0
    %p70 = por %p68, %p69
    %p71 = scmp.ne.s32.totalorder %s60, %s63
    %p72 = scmp.eq.s32.totalorder %s15, 2
    %p73 = por %p71, %p72
    %p74 = scmp.ne.s32.totalorder %s63, %s64
    %p75 = scmp.eq.s32.totalorder %s15, 0
    %p76 = por %p74, %p75
    %p77 = scmp.ne.s32.totalorder %s63, %s64
    %p78 = scmp.eq.s32.totalorder %s16, 2
    %p79 = por %p77, %p78
    %p81 = scmp.ne.s32.totalorder %s64, %s80
    %p82 = scmp.eq.s32.totalorder %s16, 0
    %p83 = por %p81, %p82
    %s84 = ssub.s32 %s17, %s29
    %p85 = scmp.eq.s32.totalorder %s84, 0
    %s87 = sadd.s32 %s86, 1
    %s88 = scalar_select %p85, %s86, %s87
    %p91 = pneg %p85
    %p92 = scmp.eq.s32.totalorder %s10, 2
    %p93 = por %p91, %p92
    %p94 = scmp.ne.s32.totalorder %s86, %s89
    %p95 = scmp.eq.s32.totalorder %s10, 0
    %p96 = por %p94, %p95
    %p97 = scmp.ne.s32.totalorder %s86, %s89
    %p98 = scmp.eq.s32.totalorder %s15, 2
    %p99 = por %p97, %p98
    %p100 = scmp.ne.s32.totalorder %s89, %s90
    %p101 = scmp.eq.s32.totalorder %s15, 0
    %p102 = por %p100, %p101
    %p103 = scmp.ne.s32.totalorder %s89, %s90
    %p104 = scmp.eq.s32.totalorder %s16, 2
    %p105 = por %p103, %p104
    %p107 = scmp.ne.s32.totalorder %s90, %s106
    %p108 = scmp.eq.s32.totalorder %s16, 0
    %p109 = por %p107, %p108
    %s110 = ssub.s32 %s17, %s29
    %p111 = scmp.eq.s32.totalorder %s110, 0
    %s113 = sadd.s32 %s112, 1
    %s114 = scalar_select %p111, %s112, %s113
    %p117 = pneg %p111
    %p118 = scmp.eq.s32.totalorder %s10, 2
    %p119 = por %p117, %p118
    %p120 = scmp.ne.s32.totalorder %s112, %s115
    %p121 = scmp.eq.s32.totalorder %s10, 0
    %p122 = por %p120, %p121
    %p123 = scmp.ne.s32.totalorder %s112, %s115
    %p124 = scmp.eq.s32.totalorder %s15, 2
    %p125 = por %p123, %p124
    %p126 = scmp.ne.s32.totalorder %s115, %s116
    %p127 = scmp.eq.s32.totalorder %s15, 0
    %p128 = por %p126, %p127
    %p129 = scmp.ne.s32.totalorder %s115, %s116
    %p130 = scmp.eq.s32.totalorder %s16, 2
    %p131 = por %p129, %p130
    %p133 = scmp.ne.s32.totalorder %s116, %s132
    %p134 = scmp.eq.s32.totalorder %s16, 0
    %p135 = por %p133, %p134
    %s136 = ssub.s32 %s18, %s25
    %s137 = ssub.s32 %s17, %s29
    %s138 = sor.u32 %s136, %s137
    %p139 = scmp.eq.s32.totalorder %s138, 0
    %s141 = sadd.s32 %s140, 1
    %s142 = scalar_select %p139, %s140, %s141
    %p145 = pneg %p139
    %p146 = scmp.eq.s32.totalorder %s10, 2
    %p147 = por %p145, %p146
    %p148 = scmp.ne.s32.totalorder %s140, %s143
    %p149 = scmp.eq.s32.totalorder %s10, 0
    %p150 = por %p148, %p149
    %p151 = scmp.ne.s32.totalorder %s140, %s143
    %p152 = scmp.eq.s32.totalorder %s15, 2
    %p153 = por %p151, %p152
    %p154 = scmp.ne.s32.totalorder %s143, %s144
    %p155 = scmp.eq.s32.totalorder %s15, 0
    %p156 = por %p154, %p155
    %p157 = scmp.ne.s32.totalorder %s143, %s144
    %p158 = scmp.eq.s32.totalorder %s16, 2
    %p159 = por %p157, %p158
    %p161 = scmp.ne.s32.totalorder %s144, %s160
    %p162 = scmp.eq.s32.totalorder %s16, 0
    %p163 = por %p161, %p162
    %p164 = scmp.le.s32.totalorder 1, %s10
    %p165 = scmp.lt.s32.totalorder %s10, 4
    %p166 = pnand %p164, %p165
    %p167 = pneg %p166
    // Predicated region
    $region9: #{basic_conv2d.1} parent=5 // pred_check
      _
    $region10: #{basic_conv2d.1} parent=5 // pred_check_branch
      %169 = sbr.rel (%p166) target = $region12
    $region11: #{basic_conv2d.1} parent=5 // pred_region
      %s170 = ssub.s32 %s10, 1
      // Predicated region
      $region13: #{basic_conv2d.1} parent=11 // pred_check
        %p171 = pneg %p102
      $region14: #{basic_conv2d.1} parent=11 // pred_check_branch
        %173 = sbr.rel (%p171) target = $region16
      $region15: #{basic_conv2d.1} parent=11 // pred_region
        %p174 = scmp.lt.s32.totalorder %s19, 0
        %s175 = scalar_select %p174, %s19, 0
        %s176 = smul.addr %s175, 4
        %s177 = scalar_lea.vmem %s2, %s176
      $region16: #{basic_conv2d.1} parent=11 // pred_fallthru
        _
      // Predicated region
      $region17: #{basic_conv2d.1} parent=11 // pred_check
        %p178 = pneg %p128
      $region18: #{basic_conv2d.1} parent=11 // pred_check_branch
        %180 = sbr.rel (%p178) target = $region20
      $region19: #{basic_conv2d.1} parent=11 // pred_region
        %p181 = scmp.lt.s32.totalorder %s19, 0
        %s182 = scalar_select %p181, %s19, 0
        %s183 = scalar_lea.vmem %s3, %s182
      $region20: #{basic_conv2d.1} parent=11 // pred_fallthru
        _
    $region12: #{basic_conv2d.1} parent=5 // pred_fallthru
      _
    %p184 = scmp.lt.s32.totalorder %s10, 3
    // Predicated region
    $region21: #{basic_conv2d.1} parent=5 // pred_check
      %p185 = pneg %p184
    $region22: #{basic_conv2d.1} parent=5 // pred_check_branch
      %187 = sbr.rel (%p185) target = $region24
    $region23: #{basic_conv2d.1} parent=5 // pred_region
      // Predicated region
      $region25: #{basic_conv2d.1} parent=23 // pred_check
        %p188 = pneg %p42
      $region26: #{basic_conv2d.1} parent=23 // pred_check_branch
        %190 = sbr.rel (%p188) target = $region28
      $region27: #{basic_conv2d.1} parent=23 // pred_region
        %s191 = smul.u32 32, %s18
        %p192 = scmp.lt.s32.totalorder %s191, 127
        %s193 = scalar_select %p192, %s191, 127
        %s194 = smul.addr %s193, 4
        %s195 = scalar_lea.vmem %s0, %s194
        %s196 = smul.u32 32, %s18
      $region28: #{basic_conv2d.1} parent=23 // pred_fallthru
        _
      // Predicated region
      $region29: #{basic_conv2d.1} parent=23 // pred_check
        %p197 = pneg %p70
      $region30: #{basic_conv2d.1} parent=23 // pred_check_branch
        %199 = sbr.rel (%p197) target = $region32
      $region31: #{basic_conv2d.1} parent=23 // pred_region
        %s200 = sadd.s32 %s18, 1
        %s201 = smul.u32 32, %s200
        %p202 = scmp.lt.s32.totalorder %s201, 127
        %s203 = scalar_select %p202, %s201, 127
        %s204 = smul.addr %s203, 4
        %s205 = scalar_lea.vmem %s1, %s204
        %s206 = sadd.s32 %s18, 1
        %s207 = smul.u32 32, %s206
      $region32: #{basic_conv2d.1} parent=23 // pred_fallthru
        _
    $region24: #{basic_conv2d.1} parent=5 // pred_fallthru
      _
    %p208 = scmp.le.s32.totalorder 1, %s10
    %p209 = scmp.lt.s32.totalorder %s10, 4
    %p210 = pnand %p208, %p209
    %p211 = pneg %p210
    // Predicated region
    $region33: #{basic_conv2d.1} parent=5 // pred_check
      _
    $region34: #{basic_conv2d.1} parent=5 // pred_check_branch
      %213 = sbr.rel (%p210) target = $region36
    $region35: #{basic_conv2d.1} parent=5 // pred_region
      %s214 = ssub.s32 %s10, 1
      %s215 = smul.u32 32, %s20
      %p216 = scmp.lt.s32.totalorder %s215, 127
      %s217 = scalar_select %p216, %s215, 127
      %s218 = smul.addr %s217, 4
      %s219 = scalar_lea.vmem %s0, %s218
      %p220 = pneg %p48
      %p221 = pneg %p45
      %s222 = sadd.s32 %s20, 1
      %s223 = smul.u32 32, %s222
      %p224 = scmp.lt.s32.totalorder %s223, 127
      %s225 = scalar_select %p224, %s223, 127
      %s226 = smul.addr %s225, 4
      %s227 = scalar_lea.vmem %s1, %s226
      %p228 = pneg %p76
      %p229 = pneg %p73
      %p230 = scmp.lt.s32.totalorder %s19, 0
      %s231 = scalar_select %p230, %s19, 0
      %s232 = smul.addr %s231, 4
      %s233 = scalar_lea.vmem %s2, %s232
      %p234 = pneg %p102
      %p235 = pneg %p99
      %p236 = scmp.lt.s32.totalorder %s19, 0
      %s237 = scalar_select %p236, %s19, 0
      %s238 = scalar_lea.vmem %s3, %s237
      %p239 = pneg %p128
      %p240 = pneg %p125
      %p241 = pneg %p156
      %p242 = pneg %p153
      %s243 = smul.u32 32, %s20
      %p244 = scmp.lt.s32.totalorder %s243, 95
      %s245 = scalar_select %p244, %s243, 95
      %p246 = scmp.lt.s32.totalorder %s19, 0
      %s247 = scalar_select %p246, %s19, 0
      %s248 = sadd.s32 %s247, %s245
      %s249 = smul.addr %s248, 8
      %s250 = scalar_lea.vmem %s4, %s249
      %s251 = smul.u32 32, %s20
      %p252 = scmp.lt.s32.totalorder %s251, 127
      %s253 = scalar_select %p252, %s251, 127
      %s254 = smul.addr %s253, 4
      %s255 = scalar_lea.vmem %s0, %s254
      %s256 = smul.u32 32, %s20
      %s257 = sadd.s32 %s20, 1
      %s258 = smul.u32 32, %s257
      %p259 = scmp.lt.s32.totalorder %s258, 127
      %s260 = scalar_select %p259, %s258, 127
      %s261 = smul.addr %s260, 4
      %s262 = scalar_lea.vmem %s1, %s261
      %s263 = sadd.s32 %s20, 1
      %s264 = smul.u32 32, %s263
      %p265 = scmp.lt.s32.totalorder %s19, 0
      %s266 = scalar_select %p265, %s19, 0
      %s267 = smul.addr %s266, 4
      %s268 = scalar_lea.vmem %s2, %s267
      %p269 = scmp.lt.s32.totalorder %s19, 0
      %s270 = scalar_select %p269, %s19, 0
      %s271 = scalar_lea.vmem %s3, %s270
      %s272 = smul.u32 32, %s20
      %p273 = scmp.lt.s32.totalorder %s272, 95
      %s274 = scalar_select %p273, %s272, 95
      %p275 = scmp.lt.s32.totalorder %s19, 0
      %s276 = scalar_select %p275, %s19, 0
      %s277 = sadd.s32 %s276, %s274
      %s278 = smul.addr %s277, 8
      %s279 = scalar_lea.vmem %s4, %s278
      %s280 = smul.u32 32, %s20
      %v282 = vld [vmem:[%s255] sm:$0xf]
      %v283 = vld [vmem:[%s255 + $0x4] sm:$0xf]
      %v284 = vld [vmem:[%s255 + $0x8] sm:$0xf]
      %v285 = vld [vmem:[%s255 + $0xc] sm:$0xf]
      %v286 = vld [vmem:[%s255 + $0x10] sm:$0xf]
      %v287 = vld [vmem:[%s255 + $0x14] sm:$0xf]
      %v288 = vld [vmem:[%s255 + $0x18] sm:$0xf]
      %v289 = vld [vmem:[%s255 + $0x1c] sm:$0xf]
      %v290 = vld [vmem:[%s255 + $0x20] sm:$0xf]
      %v291 = vld [vmem:[%s255 + $0x24] sm:$0xf]
      %v292 = vld [vmem:[%s255 + $0x28] sm:$0xf]
      %v293 = vld [vmem:[%s255 + $0x2c] sm:$0xf]
      %v294 = vld [vmem:[%s255 + $0x30] sm:$0xf]
      %v295 = vld [vmem:[%s255 + $0x34] sm:$0xf]
      %v296 = vld [vmem:[%s255 + $0x38] sm:$0xf]
      %v297 = vld [vmem:[%s255 + $0x3c] sm:$0xf]
      %v298 = vld [vmem:[%s255 + $0x40] sm:$0xf]
      %v299 = vld [vmem:[%s255 + $0x44] sm:$0xf]
      %v300 = vld [vmem:[%s255 + $0x48] sm:$0xf]
      %v301 = vld [vmem:[%s255 + $0x4c] sm:$0xf]
      %v302 = vld [vmem:[%s255 + $0x50] sm:$0xf]
      %v303 = vld [vmem:[%s255 + $0x54] sm:$0xf]
      %v304 = vld [vmem:[%s255 + $0x58] sm:$0xf]
      %v305 = vld [vmem:[%s255 + $0x5c] sm:$0xf]
      %v306 = vld [vmem:[%s255 + $0x60] sm:$0xf]
      %v307 = vld [vmem:[%s255 + $0x64] sm:$0xf]
      %v308 = vld [vmem:[%s255 + $0x68] sm:$0xf]
      %v309 = vld [vmem:[%s255 + $0x6c] sm:$0xf]
      %v310 = vld [vmem:[%s255 + $0x70] sm:$0xf]
      %v311 = vld [vmem:[%s255 + $0x74] sm:$0xf]
      %v312 = vld [vmem:[%s255 + $0x78] sm:$0xf]
      %v313 = vld [vmem:[%s255 + $0x7c] sm:$0xf]
      %v314 = vld [vmem:[%s262] sm:$0xf]
      %v315 = vld [vmem:[%s262 + $0x4] sm:$0xf]
      %v316 = vld [vmem:[%s262 + $0x8] sm:$0xf]
      %v317 = vld [vmem:[%s262 + $0xc] sm:$0xf]
      %v318 = vld [vmem:[%s262 + $0x10] sm:$0xf]
      %v319 = vld [vmem:[%s262 + $0x14] sm:$0xf]
      %v352 = vunpack.c.l.b16 %v282
      %v353 = vunpack.c.l.b16 %v283
      %v354 = vunpack.c.l.b16 %v284
      %v355 = vunpack.c.l.b16 %v285
      %v356 = vunpack.c.l.b16 %v286
      %v357 = vunpack.c.l.b16 %v287
      %v358 = vunpack.c.l.b16 %v288
      %v359 = vunpack.c.l.b16 %v289
      %v360 = vunpack.c.l.b16 %v290
      %v361 = vunpack.c.l.b16 %v291
      %v362 = vunpack.c.l.b16 %v292
      %v363 = vunpack.c.l.b16 %v293
      %v364 = vunpack.c.l.b16 %v294
      %v365 = vunpack.c.l.b16 %v295
      %v366 = vunpack.c.l.b16 %v296
      %v367 = vunpack.c.l.b16 %v297
      %v368 = vunpack.c.l.b16 %v298
      %v369 = vunpack.c.l.b16 %v299
      %v370 = vunpack.c.l.b16 %v300
      %v371 = vunpack.c.l.b16 %v301
      %v372 = vunpack.c.l.b16 %v302
      %v373 = vunpack.c.l.b16 %v303
      %v374 = vunpack.c.l.b16 %v304
      %v375 = vunpack.c.l.b16 %v305
      %v376 = vunpack.c.l.b16 %v306
      %v377 = vunpack.c.l.b16 %v307
      %v378 = vunpack.c.l.b16 %v308
      %v379 = vunpack.c.l.b16 %v309
      %v380 = vunpack.c.l.b16 %v310
      %v381 = vunpack.c.l.b16 %v311
      %v382 = vunpack.c.l.b16 %v312
      %v383 = vunpack.c.l.b16 %v313
      %v384 = vpack.c.b16 %v353, %v352
      %v385 = vpack.c.b16 %v355, %v354
      %v386 = vpack.c.b16 %v357, %v356
      %v387 = vpack.c.b16 %v359, %v358
      %v388 = vpack.c.b16 %v361, %v360
      %v389 = vpack.c.b16 %v363, %v362
      %v390 = vpack.c.b16 %v365, %v364
      %v391 = vpack.c.b16 %v367, %v366
      %v392 = vpack.c.b16 %v369, %v368
      %v393 = vpack.c.b16 %v371, %v370
      %v394 = vpack.c.b16 %v373, %v372
      %v395 = vpack.c.b16 %v375, %v374
      %v396 = vpack.c.b16 %v377, %v376
      %v397 = vpack.c.b16 %v379, %v378
      %v398 = vpack.c.b16 %v381, %v380
      %v399 = vpack.c.b16 %v383, %v382
      %v422 = vunpack.c.l.b16 %v314
      %v423 = vunpack.c.l.b16 %v315
      %v424 = vunpack.c.l.b16 %v316
      %v425 = vunpack.c.l.b16 %v317
      %v426 = vunpack.c.l.b16 %v318
      %v427 = vunpack.c.l.b16 %v319
      %v428 = vpack.c.b16 %v423, %v422
      %v429 = vpack.c.b16 %v425, %v424
      %v430 = vpack.c.b16 %v427, %v426
      %v431 = vld [vmem:[%s268] sm:$0xf]
      %v432 = vld [vmem:[%s268 + $0x4] sm:$0xf]
      %v433 = vld [vmem:[%s268 + $0x8] sm:$0xf]
      %v434 = vld [vmem:[%s268 + $0xc] sm:$0xf]
      %v435 = vld [vmem:[%s268 + $0x10] sm:$0xf]
      %v436 = vld [vmem:[%s268 + $0x14] sm:$0xf]
      %v437 = vld [vmem:[%s268 + $0x18] sm:$0xf]
      %v438 = vld [vmem:[%s268 + $0x1c] sm:$0xf]
      %v439 = vld [vmem:[%s268 + $0x20] sm:$0xf]
      %v440 = vld [vmem:[%s268 + $0x24] sm:$0xf]
      %v441 = vld [vmem:[%s268 + $0x28] sm:$0xf]
      %v442 = vld [vmem:[%s268 + $0x2c] sm:$0xf]
      %v443 = vld [vmem:[%s268 + $0x30] sm:$0xf]
      %v444 = vld [vmem:[%s268 + $0x34] sm:$0xf]
      %v445 = vld [vmem:[%s268 + $0x38] sm:$0xf]
      %v446 = vld [vmem:[%s268 + $0x3c] sm:$0xf]
      %s447 = scalar_lea.vmem %s268, 64
      %v448 = vld [vmem:[%s447] sm:$0xf]
      %v449 = vld [vmem:[%s447 + $0x4] sm:$0xf]
      %v450 = vld [vmem:[%s447 + $0x8] sm:$0xf]
      %v451 = vld [vmem:[%s447 + $0xc] sm:$0xf]
      %v452 = vld [vmem:[%s447 + $0x10] sm:$0xf]
      %v453 = vld [vmem:[%s447 + $0x14] sm:$0xf]
      %v454 = vld [vmem:[%s447 + $0x18] sm:$0xf]
      %v455 = vld [vmem:[%s447 + $0x1c] sm:$0xf]
      %v456 = vld [vmem:[%s447 + $0x20] sm:$0xf]
      %v457 = vld [vmem:[%s447 + $0x24] sm:$0xf]
      %v458 = vld [vmem:[%s447 + $0x28] sm:$0xf]
      %v459 = vld [vmem:[%s447 + $0x2c] sm:$0xf]
      %v460 = vld [vmem:[%s447 + $0x30] sm:$0xf]
      %v461 = vld [vmem:[%s447 + $0x34] sm:$0xf]
      %v462 = vld [vmem:[%s447 + $0x38] sm:$0xf]
      %v463 = vld [vmem:[%s447 + $0x3c] sm:$0xf]
      %vm464 = vsmask.f32 7424
      %v466 = vshrl.u32 %v384, 16
      %v468 = vshll.u32 %v384, 16
      %v470 = vrot.slane %v468, 1
      %v471 = vor.u32 %v466, %v470
      %v473 = vshll.u32 %v385, 16
      %v475 = vrot.slane %v473, 1
      %v476 = vsel %vm464, %v471, %v475
      %v477 = vshrl.u32 %v385, 16
      %v479 = vor.u32 %v477, %v475
      %v481 = vshll.u32 %v386, 16
      %v483 = vrot.slane %v481, 1
      %v484 = vsel %vm464, %v479, %v483
      %v485 = vshrl.u32 %v386, 16
      %v487 = vor.u32 %v485, %v483
      %v489 = vshll.u32 %v387, 16
      %v491 = vrot.slane %v489, 1
      %v492 = vsel %vm464, %v487, %v491
      %v493 = vshrl.u32 %v387, 16
      %v495 = vor.u32 %v493, %v491
      %v497 = vshll.u32 %v388, 16
      %v499 = vrot.slane %v497, 1
      %v500 = vsel %vm464, %v495, %v499
      %v501 = vshrl.u32 %v388, 16
      %v503 = vor.u32 %v501, %v499
      %v505 = vshll.u32 %v389, 16
      %v507 = vrot.slane %v505, 1
      %v508 = vsel %vm464, %v503, %v507
      %v509 = vshrl.u32 %v389, 16
      %v511 = vor.u32 %v509, %v507
      %v513 = vshll.u32 %v390, 16
      %v515 = vrot.slane %v513, 1
      %v516 = vsel %vm464, %v511, %v515
      %v517 = vshrl.u32 %v390, 16
      %v519 = vor.u32 %v517, %v515
      %v521 = vshll.u32 %v391, 16
      %v523 = vrot.slane %v521, 1
      %v524 = vsel %vm464, %v519, %v523
      %v525 = vshrl.u32 %v391, 16
      %v527 = vor.u32 %v525, %v523
      %v529 = vshll.u32 %v392, 16
      %v531 = vrot.slane %v529, 1
      %v532 = vsel %vm464, %v527, %v531
      %v533 = vshrl.u32 %v392, 16
      %v535 = vor.u32 %v533, %v531
      %v537 = vshll.u32 %v393, 16
      %v539 = vrot.slane %v537, 1
      %v540 = vsel %vm464, %v535, %v539
      %v541 = vshrl.u32 %v393, 16
      %v543 = vor.u32 %v541, %v539
      %v545 = vshll.u32 %v394, 16
      %v547 = vrot.slane %v545, 1
      %v548 = vsel %vm464, %v543, %v547
      %v549 = vshrl.u32 %v394, 16
      %v551 = vor.u32 %v549, %v547
      %v553 = vshll.u32 %v395, 16
      %v555 = vrot.slane %v553, 1
      %v556 = vsel %vm464, %v551, %v555
      %v557 = vshrl.u32 %v395, 16
      %v559 = vor.u32 %v557, %v555
      %v561 = vshll.u32 %v396, 16
      %v563 = vrot.slane %v561, 1
      %v564 = vsel %vm464, %v559, %v563
      %v565 = vshrl.u32 %v396, 16
      %v567 = vor.u32 %v565, %v563
      %v569 = vshll.u32 %v397, 16
      %v571 = vrot.slane %v569, 1
      %v572 = vsel %vm464, %v567, %v571
      %v573 = vshrl.u32 %v397, 16
      %v575 = vor.u32 %v573, %v571
      %v577 = vshll.u32 %v398, 16
      %v579 = vrot.slane %v577, 1
      %v580 = vsel %vm464, %v575, %v579
      %v581 = vshrl.u32 %v398, 16
      %v583 = vor.u32 %v581, %v579
      %v585 = vshll.u32 %v399, 16
      %v587 = vrot.slane %v585, 1
      %v588 = vsel %vm464, %v583, %v587
      %v589 = vshrl.u32 %v399, 16
      %v591 = vor.u32 %v589, %v587
      %v593 = vshll.u32 %v428, 16
      %v595 = vrot.slane %v593, 1
      %v596 = vsel %vm464, %v591, %v595
      %v629 = vunpack.c.l.b16 %v448
      %v630 = vunpack.c.l.b16 %v449
      %v631 = vunpack.c.l.b16 %v450
      %v632 = vunpack.c.l.b16 %v451
      %v633 = vunpack.c.l.b16 %v452
      %v634 = vunpack.c.l.b16 %v453
      %v635 = vunpack.c.l.b16 %v454
      %v636 = vunpack.c.l.b16 %v455
      %v637 = vunpack.c.l.b16 %v456
      %v638 = vunpack.c.l.b16 %v457
      %v639 = vunpack.c.l.b16 %v458
      %v640 = vunpack.c.l.b16 %v459
      %v641 = vunpack.c.l.b16 %v460
      %v642 = vunpack.c.l.b16 %v461
      %v643 = vunpack.c.l.b16 %v462
      %v644 = vunpack.c.l.b16 %v463
      %v645 = vpack.c.b16 %v630, %v629
      %v646 = vpack.c.b16 %v632, %v631
      %v647 = vpack.c.b16 %v634, %v633
      %v648 = vpack.c.b16 %v636, %v635
      %v649 = vpack.c.b16 %v638, %v637
      %v650 = vpack.c.b16 %v640, %v639
      %v651 = vpack.c.b16 %v642, %v641
      %v652 = vpack.c.b16 %v644, %v643
      %661 = vmatprep.subr.bf16.mxu0 0
      %662 = vmatpush1.bf16.msra.mxu0 %v652
      %663 = vmatprep.subr.bf16.mxu0 0
      %664 = vmatpush1.bf16.msra.mxu0 %v651
      %665 = vmatprep.subr.bf16.mxu0 0
      %666 = vmatpush1.bf16.msra.mxu0 %v650
      %667 = vmatprep.subr.bf16.mxu0 0
      %668 = vmatpush1.bf16.msra.mxu0 %v649
      %669 = vmatprep.subr.bf16.mxu0 0
      %670 = vmatpush1.bf16.msra.mxu0 %v648
      %671 = vmatprep.subr.bf16.mxu0 0
      %672 = vmatpush1.bf16.msra.mxu0 %v647
      %673 = vmatprep.subr.bf16.mxu0 0
      %674 = vmatpush1.bf16.msra.mxu0 %v646
      %675 = vmatprep.subr.bf16.mxu0 0
      %676 = vmatpush1.bf16.msra.mxu0 %v645
      %677 = vmatprep.subr.bf16.mxu0 0
      %678 = vmatpush2.bf16.msra.mxu0 0
      %679 = vmatprep.subr.bf16.mxu0 0
      %680 = vmatpush2.bf16.msra.mxu0 0
      %681 = vmatprep.subr.bf16.mxu0 0
      %682 = vmatpush2.bf16.msra.mxu0 0
      %683 = vmatprep.subr.bf16.mxu0 0
      %684 = vmatpush2.bf16.msra.mxu0 0
      %685 = vmatprep.subr.bf16.mxu0 0
      %686 = vmatpush2.bf16.msra.mxu0 0
      %687 = vmatprep.subr.bf16.mxu0 0
      %688 = vmatpush2.bf16.msra.mxu0 0
      %689 = vmatprep.subr.bf16.mxu0 0
      %690 = vmatpush2.bf16.msra.mxu0 0
      %691 = vmatprep.subr.bf16.mxu0 0
      %692 = vmatpush2.bf16.msra.mxu0 0
      %693 = vmatprep.mubr.bf16.mxu0 0
      %694 = vmatmul.mubr.bf16.gmra.mxu0 %v476
      %v695 = vpop.f32.mrf.mxu0
      %v696 = vadd.f32 0.0, %v695
      %v697 = vpop.f32.mrf.mxu0
      %v698 = vpop.f32.mrf.mxu0
      %v699 = vadd.f32 0.0, %v698
      %v700 = vpop.f32.mrf.mxu0
      %701 = vmatprep.mubr.bf16.mxu0 0
      %702 = vmatmul.mubr.bf16.gmra.mxu0 %v484
      %v703 = vpop.f32.mrf.mxu0
      %v704 = vadd.f32 0.0, %v703
      %v705 = vpop.f32.mrf.mxu0
      %v706 = vpop.f32.mrf.mxu0
      %v707 = vadd.f32 0.0, %v706
      %v708 = vpop.f32.mrf.mxu0
      %709 = vmatprep.mubr.bf16.mxu0 0
      %710 = vmatmul.mubr.bf16.gmra.mxu0 %v492
      %v711 = vpop.f32.mrf.mxu0
      %v712 = vadd.f32 0.0, %v711
      %v713 = vpop.f32.mrf.mxu0
      %v714 = vpop.f32.mrf.mxu0
      %v715 = vadd.f32 0.0, %v714
      %v716 = vpop.f32.mrf.mxu0
      %717 = vmatprep.mubr.bf16.mxu0 0
      %718 = vmatmul.mubr.bf16.gmra.mxu0 %v500
      %v719 = vpop.f32.mrf.mxu0
      %v720 = vadd.f32 0.0, %v719
      %v721 = vpop.f32.mrf.mxu0
      %v722 = vpop.f32.mrf.mxu0
      %v723 = vadd.f32 0.0, %v722
      %v724 = vpop.f32.mrf.mxu0
      %725 = vmatprep.mubr.bf16.mxu0 0
      %726 = vmatmul.mubr.bf16.gmra.mxu0 %v508
      %v727 = vpop.f32.mrf.mxu0
      %v728 = vadd.f32 0.0, %v727
      %v729 = vpop.f32.mrf.mxu0
      %v730 = vpop.f32.mrf.mxu0
      %v731 = vadd.f32 0.0, %v730
      %v732 = vpop.f32.mrf.mxu0
      %733 = vmatprep.mubr.bf16.mxu0 0
      %734 = vmatmul.mubr.bf16.gmra.mxu0 %v516
      %v735 = vpop.f32.mrf.mxu0
      %v736 = vadd.f32 0.0, %v735
      %v737 = vpop.f32.mrf.mxu0
      %v738 = vpop.f32.mrf.mxu0
      %v739 = vadd.f32 0.0, %v738
      %v740 = vpop.f32.mrf.mxu0
      %741 = vmatprep.mubr.bf16.mxu0 0
      %742 = vmatmul.mubr.bf16.gmra.mxu0 %v524
      %v743 = vpop.f32.mrf.mxu0
      %v744 = vadd.f32 0.0, %v743
      %v745 = vpop.f32.mrf.mxu0
      %v746 = vpop.f32.mrf.mxu0
      %v747 = vadd.f32 0.0, %v746
      %v748 = vpop.f32.mrf.mxu0
      %749 = vmatprep.mubr.bf16.mxu0 0
      %750 = vmatmul.mubr.bf16.gmra.mxu0 %v532
      %v751 = vpop.f32.mrf.mxu0
      %v752 = vadd.f32 0.0, %v751
      %v753 = vpop.f32.mrf.mxu0
      %v754 = vpop.f32.mrf.mxu0
      %v755 = vadd.f32 0.0, %v754
      %v756 = vpop.f32.mrf.mxu0
      %757 = vmatprep.mubr.bf16.mxu0 0
      %758 = vmatmul.mubr.bf16.gmra.mxu0 %v540
      %v759 = vpop.f32.mrf.mxu0
      %v760 = vadd.f32 0.0, %v759
      %v761 = vpop.f32.mrf.mxu0
      %v762 = vpop.f32.mrf.mxu0
      %v763 = vadd.f32 0.0, %v762
      %v764 = vpop.f32.mrf.mxu0
      %765 = vmatprep.mubr.bf16.mxu0 0
      %766 = vmatmul.mubr.bf16.gmra.mxu0 %v548
      %v767 = vpop.f32.mrf.mxu0
      %v768 = vadd.f32 0.0, %v767
      %v769 = vpop.f32.mrf.mxu0
      %v770 = vpop.f32.mrf.mxu0
      %v771 = vadd.f32 0.0, %v770
      %v772 = vpop.f32.mrf.mxu0
      %773 = vmatprep.mubr.bf16.mxu0 0
      %774 = vmatmul.mubr.bf16.gmra.mxu0 %v556
      %v775 = vpop.f32.mrf.mxu0
      %v776 = vadd.f32 0.0, %v775
      %v777 = vpop.f32.mrf.mxu0
      %v778 = vpop.f32.mrf.mxu0
      %v779 = vadd.f32 0.0, %v778
      %v780 = vpop.f32.mrf.mxu0
      %781 = vmatprep.mubr.bf16.mxu0 0
      %782 = vmatmul.mubr.bf16.gmra.mxu0 %v564
      %v783 = vpop.f32.mrf.mxu0
      %v784 = vadd.f32 0.0, %v783
      %v785 = vpop.f32.mrf.mxu0
      %v786 = vpop.f32.mrf.mxu0
      %v787 = vadd.f32 0.0, %v786
      %v788 = vpop.f32.mrf.mxu0
      %789 = vmatprep.mubr.bf16.mxu0 0
      %790 = vmatmul.mubr.bf16.gmra.mxu0 %v572
      %v791 = vpop.f32.mrf.mxu0
      %v792 = vadd.f32 0.0, %v791
      %v793 = vpop.f32.mrf.mxu0
      %v794 = vpop.f32.mrf.mxu0
      %v795 = vadd.f32 0.0, %v794
      %v796 = vpop.f32.mrf.mxu0
      %797 = vmatprep.mubr.bf16.mxu0 0
      %798 = vmatmul.mubr.bf16.gmra.mxu0 %v580
      %v799 = vpop.f32.mrf.mxu0
      %v800 = vadd.f32 0.0, %v799
      %v801 = vpop.f32.mrf.mxu0
      %v802 = vpop.f32.mrf.mxu0
      %v803 = vadd.f32 0.0, %v802
      %v804 = vpop.f32.mrf.mxu0
      %805 = vmatprep.mubr.bf16.mxu0 0
      %806 = vmatmul.mubr.bf16.gmra.mxu0 %v588
      %v807 = vpop.f32.mrf.mxu0
      %v808 = vadd.f32 0.0, %v807
      %v809 = vpop.f32.mrf.mxu0
      %v810 = vpop.f32.mrf.mxu0
      %v811 = vadd.f32 0.0, %v810
      %v812 = vpop.f32.mrf.mxu0
      %813 = vmatprep.mubr.bf16.mxu0 0
      %814 = vmatmul.mubr.bf16.gmra.mxu0 %v596
      %v815 = vpop.f32.mrf.mxu0
      %v816 = vadd.f32 0.0, %v815
      %v817 = vpop.f32.mrf.mxu0
      %v818 = vpop.f32.mrf.mxu0
      %v819 = vadd.f32 0.0, %v818
      %v820 = vpop.f32.mrf.mxu0
      %821 = vdwg.mxu0
      %v838 = vunpack.c.l.b16 %v431
      %v839 = vunpack.c.l.b16 %v432
      %v840 = vunpack.c.l.b16 %v433
      %v841 = vunpack.c.l.b16 %v434
      %v842 = vunpack.c.l.b16 %v435
      %v843 = vunpack.c.l.b16 %v436
      %v844 = vunpack.c.l.b16 %v437
      %v845 = vunpack.c.l.b16 %v438
      %v846 = vunpack.c.l.b16 %v439
      %v847 = vunpack.c.l.b16 %v440
      %v848 = vunpack.c.l.b16 %v441
      %v849 = vunpack.c.l.b16 %v442
      %v850 = vunpack.c.l.b16 %v443
      %v851 = vunpack.c.l.b16 %v444
      %v852 = vunpack.c.l.b16 %v445
      %v853 = vunpack.c.l.b16 %v446
      %v854 = vpack.c.b16 %v839, %v838
      %v855 = vpack.c.b16 %v841, %v840
      %v856 = vpack.c.b16 %v843, %v842
      %v857 = vpack.c.b16 %v845, %v844
      %v858 = vpack.c.b16 %v847, %v846
      %v859 = vpack.c.b16 %v849, %v848
      %v860 = vpack.c.b16 %v851, %v850
      %v861 = vpack.c.b16 %v853, %v852
      %870 = vmatprep.subr.bf16.mxu0 0
      %871 = vmatpush1.bf16.msra.mxu0 %v861
      %872 = vmatprep.subr.bf16.mxu0 0
      %873 = vmatpush1.bf16.msra.mxu0 %v860
      %874 = vmatprep.subr.bf16.mxu0 0
      %875 = vmatpush1.bf16.msra.mxu0 %v859
      %876 = vmatprep.subr.bf16.mxu0 0
      %877 = vmatpush1.bf16.msra.mxu0 %v858
      %878 = vmatprep.subr.bf16.mxu0 0
      %879 = vmatpush1.bf16.msra.mxu0 %v857
      %880 = vmatprep.subr.bf16.mxu0 0
      %881 = vmatpush1.bf16.msra.mxu0 %v856
      %882 = vmatprep.subr.bf16.mxu0 0
      %883 = vmatpush1.bf16.msra.mxu0 %v855
      %884 = vmatprep.subr.bf16.mxu0 0
      %885 = vmatpush1.bf16.msra.mxu0 %v854
      %886 = vmatprep.subr.bf16.mxu0 0
      %887 = vmatpush2.bf16.msra.mxu0 0
      %888 = vmatprep.subr.bf16.mxu0 0
      %889 = vmatpush2.bf16.msra.mxu0 0
      %890 = vmatprep.subr.bf16.mxu0 0
      %891 = vmatpush2.bf16.msra.mxu0 0
      %892 = vmatprep.subr.bf16.mxu0 0
      %893 = vmatpush2.bf16.msra.mxu0 0
      %894 = vmatprep.subr.bf16.mxu0 0
      %895 = vmatpush2.bf16.msra.mxu0 0
      %896 = vmatprep.subr.bf16.mxu0 0
      %897 = vmatpush2.bf16.msra.mxu0 0
      %898 = vmatprep.subr.bf16.mxu0 0
      %899 = vmatpush2.bf16.msra.mxu0 0
      %900 = vmatprep.subr.bf16.mxu0 0
      %901 = vmatpush2.bf16.msra.mxu0 0
      %902 = vmatprep.mubr.bf16.mxu0 0
      %903 = vmatmul.mubr.bf16.gmra.mxu0 %v384
      %v904 = vpop.f32.mrf.mxu0
      %v905 = vadd.f32 %v696, %v904
      %v906 = vpop.f32.mrf.mxu0
      %v907 = vpop.f32.mrf.mxu0
      %v908 = vadd.f32 %v699, %v907
      %v909 = vpop.f32.mrf.mxu0
      %910 = vmatprep.mubr.bf16.mxu0 0
      %911 = vmatmul.mubr.bf16.gmra.mxu0 %v385
      %v912 = vpop.f32.mrf.mxu0
      %v913 = vadd.f32 %v704, %v912
      %v914 = vpop.f32.mrf.mxu0
      %v915 = vpop.f32.mrf.mxu0
      %v916 = vadd.f32 %v707, %v915
      %v917 = vpop.f32.mrf.mxu0
      %918 = vmatprep.mubr.bf16.mxu0 0
      %919 = vmatmul.mubr.bf16.gmra.mxu0 %v386
      %v920 = vpop.f32.mrf.mxu0
      %v921 = vadd.f32 %v712, %v920
      %v922 = vpop.f32.mrf.mxu0
      %v923 = vpop.f32.mrf.mxu0
      %v924 = vadd.f32 %v715, %v923
      %v925 = vpop.f32.mrf.mxu0
      %926 = vmatprep.mubr.bf16.mxu0 0
      %927 = vmatmul.mubr.bf16.gmra.mxu0 %v387
      %v928 = vpop.f32.mrf.mxu0
      %v929 = vadd.f32 %v720, %v928
      %v930 = vpop.f32.mrf.mxu0
      %v931 = vpop.f32.mrf.mxu0
      %v932 = vadd.f32 %v723, %v931
      %v933 = vpop.f32.mrf.mxu0
      %934 = vmatprep.mubr.bf16.mxu0 0
      %935 = vmatmul.mubr.bf16.gmra.mxu0 %v388
      %v936 = vpop.f32.mrf.mxu0
      %v937 = vadd.f32 %v728, %v936
      %v938 = vpop.f32.mrf.mxu0
      %v939 = vpop.f32.mrf.mxu0
      %v940 = vadd.f32 %v731, %v939
      %v941 = vpop.f32.mrf.mxu0
      %942 = vmatprep.mubr.bf16.mxu0 0
      %943 = vmatmul.mubr.bf16.gmra.mxu0 %v389
      %v944 = vpop.f32.mrf.mxu0
      %v945 = vadd.f32 %v736, %v944
      %v946 = vpop.f32.mrf.mxu0
      %v947 = vpop.f32.mrf.mxu0
      %v948 = vadd.f32 %v739, %v947
      %v949 = vpop.f32.mrf.mxu0
      %950 = vmatprep.mubr.bf16.mxu0 0
      %951 = vmatmul.mubr.bf16.gmra.mxu0 %v390
      %v952 = vpop.f32.mrf.mxu0
      %v953 = vadd.f32 %v744, %v952
      %v954 = vpop.f32.mrf.mxu0
      %v955 = vpop.f32.mrf.mxu0
      %v956 = vadd.f32 %v747, %v955
      %v957 = vpop.f32.mrf.mxu0
      %958 = vmatprep.mubr.bf16.mxu0 0
      %959 = vmatmul.mubr.bf16.gmra.mxu0 %v391
      %v960 = vpop.f32.mrf.mxu0
      %v961 = vadd.f32 %v752, %v960
      %v962 = vpop.f32.mrf.mxu0
      %v963 = vpop.f32.mrf.mxu0
      %v964 = vadd.f32 %v755, %v963
      %v965 = vpop.f32.mrf.mxu0
      %966 = vmatprep.mubr.bf16.mxu0 0
      %967 = vmatmul.mubr.bf16.gmra.mxu0 %v392
      %v968 = vpop.f32.mrf.mxu0
      %v969 = vadd.f32 %v760, %v968
      %v970 = vpop.f32.mrf.mxu0
      %v971 = vpop.f32.mrf.mxu0
      %v972 = vadd.f32 %v763, %v971
      %v973 = vpop.f32.mrf.mxu0
      %974 = vmatprep.mubr.bf16.mxu0 0
      %975 = vmatmul.mubr.bf16.gmra.mxu0 %v393
      %v976 = vpop.f32.mrf.mxu0
      %v977 = vadd.f32 %v768, %v976
      %v978 = vpop.f32.mrf.mxu0
      %v979 = vpop.f32.mrf.mxu0
      %v980 = vadd.f32 %v771, %v979
      %v981 = vpop.f32.mrf.mxu0
      %982 = vmatprep.mubr.bf16.mxu0 0
      %983 = vmatmul.mubr.bf16.gmra.mxu0 %v394
      %v984 = vpop.f32.mrf.mxu0
      %v985 = vadd.f32 %v776, %v984
      %v986 = vpop.f32.mrf.mxu0
      %v987 = vpop.f32.mrf.mxu0
      %v988 = vadd.f32 %v779, %v987
      %v989 = vpop.f32.mrf.mxu0
      %990 = vmatprep.mubr.bf16.mxu0 0
      %991 = vmatmul.mubr.bf16.gmra.mxu0 %v395
      %v992 = vpop.f32.mrf.mxu0
      %v993 = vadd.f32 %v784, %v992
      %v994 = vpop.f32.mrf.mxu0
      %v995 = vpop.f32.mrf.mxu0
      %v996 = vadd.f32 %v787, %v995
      %v997 = vpop.f32.mrf.mxu0
      %998 = vmatprep.mubr.bf16.mxu0 0
      %999 = vmatmul.mubr.bf16.gmra.mxu0 %v396
      %v1000 = vpop.f32.mrf.mxu0
      %v1001 = vadd.f32 %v792, %v1000
      %v1002 = vpop.f32.mrf.mxu0
      %v1003 = vpop.f32.mrf.mxu0
      %v1004 = vadd.f32 %v795, %v1003
      %v1005 = vpop.f32.mrf.mxu0
      %1006 = vmatprep.mubr.bf16.mxu0 0
      %1007 = vmatmul.mubr.bf16.gmra.mxu0 %v397
      %v1008 = vpop.f32.mrf.mxu0
      %v1009 = vadd.f32 %v800, %v1008
      %v1010 = vpop.f32.mrf.mxu0
      %v1011 = vpop.f32.mrf.mxu0
      %v1012 = vadd.f32 %v803, %v1011
      %v1013 = vpop.f32.mrf.mxu0
      %1014 = vmatprep.mubr.bf16.mxu0 0
      %1015 = vmatmul.mubr.bf16.gmra.mxu0 %v398
      %v1016 = vpop.f32.mrf.mxu0
      %v1017 = vadd.f32 %v808, %v1016
      %v1018 = vpop.f32.mrf.mxu0
      %v1019 = vpop.f32.mrf.mxu0
      %v1020 = vadd.f32 %v811, %v1019
      %v1021 = vpop.f32.mrf.mxu0
      %1022 = vmatprep.mubr.bf16.mxu0 0
      %1023 = vmatmul.mubr.bf16.gmra.mxu0 %v399
      %v1024 = vpop.f32.mrf.mxu0
      %v1025 = vadd.f32 %v816, %v1024
      %v1026 = vpop.f32.mrf.mxu0
      %v1027 = vpop.f32.mrf.mxu0
      %v1028 = vadd.f32 %v819, %v1027
      %v1029 = vpop.f32.mrf.mxu0
      %1030 = vdwg.mxu0
      %s1031 = scalar_lea.vmem %s268, 128
      %v1032 = vld [vmem:[%s1031] sm:$0xf]
      %v1033 = vld [vmem:[%s1031 + $0x4] sm:$0xf]
      %v1034 = vld [vmem:[%s1031 + $0x8] sm:$0xf]
      %v1035 = vld [vmem:[%s1031 + $0xc] sm:$0xf]
      %v1036 = vld [vmem:[%s1031 + $0x10] sm:$0xf]
      %v1037 = vld [vmem:[%s1031 + $0x14] sm:$0xf]
      %v1038 = vld [vmem:[%s1031 + $0x18] sm:$0xf]
      %v1039 = vld [vmem:[%s1031 + $0x1c] sm:$0xf]
      %v1040 = vld [vmem:[%s1031 + $0x20] sm:$0xf]
      %v1041 = vld [vmem:[%s1031 + $0x24] sm:$0xf]
      %v1042 = vld [vmem:[%s1031 + $0x28] sm:$0xf]
      %v1043 = vld [vmem:[%s1031 + $0x2c] sm:$0xf]
      %v1044 = vld [vmem:[%s1031 + $0x30] sm:$0xf]
      %v1045 = vld [vmem:[%s1031 + $0x34] sm:$0xf]
      %v1046 = vld [vmem:[%s1031 + $0x38] sm:$0xf]
      %v1047 = vld [vmem:[%s1031 + $0x3c] sm:$0xf]
      %vm1048 = vcmask 1046528
      %v1049 = vrot.slane %v384, 1
      %v1050 = vrot.slane %v385, 1
      %v1051 = vsel %vm1048, %v1049, %v1050
      %v1052 = vrot.slane %v386, 1
      %v1053 = vsel %vm1048, %v1050, %v1052
      %v1054 = vrot.slane %v387, 1
      %v1055 = vsel %vm1048, %v1052, %v1054
      %v1056 = vrot.slane %v388, 1
      %v1057 = vsel %vm1048, %v1054, %v1056
      %v1058 = vrot.slane %v389, 1
      %v1059 = vsel %vm1048, %v1056, %v1058
      %v1060 = vrot.slane %v390, 1
      %v1061 = vsel %vm1048, %v1058, %v1060
      %v1062 = vrot.slane %v391, 1
      %v1063 = vsel %vm1048, %v1060, %v1062
      %v1064 = vrot.slane %v392, 1
      %v1065 = vsel %vm1048, %v1062, %v1064
      %v1066 = vrot.slane %v393, 1
      %v1067 = vsel %vm1048, %v1064, %v1066
      %v1068 = vrot.slane %v394, 1
      %v1069 = vsel %vm1048, %v1066, %v1068
      %v1070 = vrot.slane %v395, 1
      %v1071 = vsel %vm1048, %v1068, %v1070
      %v1072 = vrot.slane %v396, 1
      %v1073 = vsel %vm1048, %v1070, %v1072
      %v1074 = vrot.slane %v397, 1
      %v1075 = vsel %vm1048, %v1072, %v1074
      %v1076 = vrot.slane %v398, 1
      %v1077 = vsel %vm1048, %v1074, %v1076
      %v1078 = vrot.slane %v399, 1
      %v1079 = vsel %vm1048, %v1076, %v1078
      %v1080 = vrot.slane %v428, 1
      %v1081 = vsel %vm1048, %v1078, %v1080
      %v1114 = vunpack.c.l.b16 %v1032
      %v1115 = vunpack.c.l.b16 %v1033
      %v1116 = vunpack.c.l.b16 %v1034
      %v1117 = vunpack.c.l.b16 %v1035
      %v1118 = vunpack.c.l.b16 %v1036
      %v1119 = vunpack.c.l.b16 %v1037
      %v1120 = vunpack.c.l.b16 %v1038
      %v1121 = vunpack.c.l.b16 %v1039
      %v1122 = vunpack.c.l.b16 %v1040
      %v1123 = vunpack.c.l.b16 %v1041
      %v1124 = vunpack.c.l.b16 %v1042
      %v1125 = vunpack.c.l.b16 %v1043
      %v1126 = vunpack.c.l.b16 %v1044
      %v1127 = vunpack.c.l.b16 %v1045
      %v1128 = vunpack.c.l.b16 %v1046
      %v1129 = vunpack.c.l.b16 %v1047
      %v1130 = vpack.c.b16 %v1115, %v1114
      %v1131 = vpack.c.b16 %v1117, %v1116
      %v1132 = vpack.c.b16 %v1119, %v1118
      %v1133 = vpack.c.b16 %v1121, %v1120
      %v1134 = vpack.c.b16 %v1123, %v1122
      %v1135 = vpack.c.b16 %v1125, %v1124
      %v1136 = vpack.c.b16 %v1127, %v1126
      %v1137 = vpack.c.b16 %v1129, %v1128
      %1146 = vmatprep.subr.bf16.mxu0 0
      %1147 = vmatpush1.bf16.msra.mxu0 %v1137
      %1148 = vmatprep.subr.bf16.mxu0 0
      %1149 = vmatpush1.bf16.msra.mxu0 %v1136
      %1150 = vmatprep.subr.bf16.mxu0 0
      %1151 = vmatpush1.bf16.msra.mxu0 %v1135
      %1152 = vmatprep.subr.bf16.mxu0 0
      %1153 = vmatpush1.bf16.msra.mxu0 %v1134
      %1154 = vmatprep.subr.bf16.mxu0 0
      %1155 = vmatpush1.bf16.msra.mxu0 %v1133
      %1156 = vmatprep.subr.bf16.mxu0 0
      %1157 = vmatpush1.bf16.msra.mxu0 %v1132
      %1158 = vmatprep.subr.bf16.mxu0 0
      %1159 = vmatpush1.bf16.msra.mxu0 %v1131
      %1160 = vmatprep.subr.bf16.mxu0 0
      %1161 = vmatpush1.bf16.msra.mxu0 %v1130
      %1162 = vmatprep.subr.bf16.mxu0 0
      %1163 = vmatpush2.bf16.msra.mxu0 0
      %1164 = vmatprep.subr.bf16.mxu0 0
      %1165 = vmatpush2.bf16.msra.mxu0 0
      %1166 = vmatprep.subr.bf16.mxu0 0
      %1167 = vmatpush2.bf16.msra.mxu0 0
      %1168 = vmatprep.subr.bf16.mxu0 0
      %1169 = vmatpush2.bf16.msra.mxu0 0
      %1170 = vmatprep.subr.bf16.mxu0 0
      %1171 = vmatpush2.bf16.msra.mxu0 0
      %1172 = vmatprep.subr.bf16.mxu0 0
      %1173 = vmatpush2.bf16.msra.mxu0 0
      %1174 = vmatprep.subr.bf16.mxu0 0
      %1175 = vmatpush2.bf16.msra.mxu0 0
      %1176 = vmatprep.subr.bf16.mxu0 0
      %1177 = vmatpush2.bf16.msra.mxu0 0
      %1178 = vmatprep.mubr.bf16.mxu0 0
      %1179 = vmatmul.mubr.bf16.gmra.mxu0 %v1051
      %v1180 = vpop.f32.mrf.mxu0
      %v1181 = vadd.f32 0.0, %v1180
      %v1182 = vpop.f32.mrf.mxu0
      %v1183 = vpop.f32.mrf.mxu0
      %v1184 = vadd.f32 0.0, %v1183
      %v1185 = vpop.f32.mrf.mxu0
      %1186 = vmatprep.mubr.bf16.mxu0 0
      %1187 = vmatmul.mubr.bf16.gmra.mxu0 %v1053
      %v1188 = vpop.f32.mrf.mxu0
      %v1189 = vadd.f32 0.0, %v1188
      %v1190 = vpop.f32.mrf.mxu0
      %v1191 = vpop.f32.mrf.mxu0
      %v1192 = vadd.f32 0.0, %v1191
      %v1193 = vpop.f32.mrf.mxu0
      %1194 = vmatprep.mubr.bf16.mxu0 0
      %1195 = vmatmul.mubr.bf16.gmra.mxu0 %v1055
      %v1196 = vpop.f32.mrf.mxu0
      %v1197 = vadd.f32 0.0, %v1196
      %v1198 = vpop.f32.mrf.mxu0
      %v1199 = vpop.f32.mrf.mxu0
      %v1200 = vadd.f32 0.0, %v1199
      %v1201 = vpop.f32.mrf.mxu0
      %1202 = vmatprep.mubr.bf16.mxu0 0
      %1203 = vmatmul.mubr.bf16.gmra.mxu0 %v1057
      %v1204 = vpop.f32.mrf.mxu0
      %v1205 = vadd.f32 0.0, %v1204
      %v1206 = vpop.f32.mrf.mxu0
      %v1207 = vpop.f32.mrf.mxu0
      %v1208 = vadd.f32 0.0, %v1207
      %v1209 = vpop.f32.mrf.mxu0
      %1210 = vmatprep.mubr.bf16.mxu0 0
      %1211 = vmatmul.mubr.bf16.gmra.mxu0 %v1059
      %v1212 = vpop.f32.mrf.mxu0
      %v1213 = vadd.f32 0.0, %v1212
      %v1214 = vpop.f32.mrf.mxu0
      %v1215 = vpop.f32.mrf.mxu0
      %v1216 = vadd.f32 0.0, %v1215
      %v1217 = vpop.f32.mrf.mxu0
      %1218 = vmatprep.mubr.bf16.mxu0 0
      %1219 = vmatmul.mubr.bf16.gmra.mxu0 %v1061
      %v1220 = vpop.f32.mrf.mxu0
      %v1221 = vadd.f32 0.0, %v1220
      %v1222 = vpop.f32.mrf.mxu0
      %v1223 = vpop.f32.mrf.mxu0
      %v1224 = vadd.f32 0.0, %v1223
      %v1225 = vpop.f32.mrf.mxu0
      %1226 = vmatprep.mubr.bf16.mxu0 0
      %1227 = vmatmul.mubr.bf16.gmra.mxu0 %v1063
      %v1228 = vpop.f32.mrf.mxu0
      %v1229 = vadd.f32 0.0, %v1228
      %v1230 = vpop.f32.mrf.mxu0
      %v1231 = vpop.f32.mrf.mxu0
      %v1232 = vadd.f32 0.0, %v1231
      %v1233 = vpop.f32.mrf.mxu0
      %1234 = vmatprep.mubr.bf16.mxu0 0
      %1235 = vmatmul.mubr.bf16.gmra.mxu0 %v1065
      %v1236 = vpop.f32.mrf.mxu0
      %v1237 = vadd.f32 0.0, %v1236
      %v1238 = vpop.f32.mrf.mxu0
      %v1239 = vpop.f32.mrf.mxu0
      %v1240 = vadd.f32 0.0, %v1239
      %v1241 = vpop.f32.mrf.mxu0
      %1242 = vmatprep.mubr.bf16.mxu0 0
      %1243 = vmatmul.mubr.bf16.gmra.mxu0 %v1067
      %v1244 = vpop.f32.mrf.mxu0
      %v1245 = vadd.f32 0.0, %v1244
      %v1246 = vpop.f32.mrf.mxu0
      %v1247 = vpop.f32.mrf.mxu0
      %v1248 = vadd.f32 0.0, %v1247
      %v1249 = vpop.f32.mrf.mxu0
      %1250 = vmatprep.mubr.bf16.mxu0 0
      %1251 = vmatmul.mubr.bf16.gmra.mxu0 %v1069
      %v1252 = vpop.f32.mrf.mxu0
      %v1253 = vadd.f32 0.0, %v1252
      %v1254 = vpop.f32.mrf.mxu0
      %v1255 = vpop.f32.mrf.mxu0
      %v1256 = vadd.f32 0.0, %v1255
      %v1257 = vpop.f32.mrf.mxu0
      %1258 = vmatprep.mubr.bf16.mxu0 0
      %1259 = vmatmul.mubr.bf16.gmra.mxu0 %v1071
      %v1260 = vpop.f32.mrf.mxu0
      %v1261 = vadd.f32 0.0, %v1260
      %v1262 = vpop.f32.mrf.mxu0
      %v1263 = vpop.f32.mrf.mxu0
      %v1264 = vadd.f32 0.0, %v1263
      %v1265 = vpop.f32.mrf.mxu0
      %1266 = vmatprep.mubr.bf16.mxu0 0
      %1267 = vmatmul.mubr.bf16.gmra.mxu0 %v1073
      %v1268 = vpop.f32.mrf.mxu0
      %v1269 = vadd.f32 0.0, %v1268
      %v1270 = vpop.f32.mrf.mxu0
      %v1271 = vpop.f32.mrf.mxu0
      %v1272 = vadd.f32 0.0, %v1271
      %v1273 = vpop.f32.mrf.mxu0
      %1274 = vmatprep.mubr.bf16.mxu0 0
      %1275 = vmatmul.mubr.bf16.gmra.mxu0 %v1075
      %v1276 = vpop.f32.mrf.mxu0
      %v1277 = vadd.f32 0.0, %v1276
      %v1278 = vpop.f32.mrf.mxu0
      %v1279 = vpop.f32.mrf.mxu0
      %v1280 = vadd.f32 0.0, %v1279
      %v1281 = vpop.f32.mrf.mxu0
      %1282 = vmatprep.mubr.bf16.mxu0 0
      %1283 = vmatmul.mubr.bf16.gmra.mxu0 %v1077
      %v1284 = vpop.f32.mrf.mxu0
      %v1285 = vadd.f32 0.0, %v1284
      %v1286 = vpop.f32.mrf.mxu0
      %v1287 = vpop.f32.mrf.mxu0
      %v1288 = vadd.f32 0.0, %v1287
      %v1289 = vpop.f32.mrf.mxu0
      %1290 = vmatprep.mubr.bf16.mxu0 0
      %1291 = vmatmul.mubr.bf16.gmra.mxu0 %v1079
      %v1292 = vpop.f32.mrf.mxu0
      %v1293 = vadd.f32 0.0, %v1292
      %v1294 = vpop.f32.mrf.mxu0
      %v1295 = vpop.f32.mrf.mxu0
      %v1296 = vadd.f32 0.0, %v1295
      %v1297 = vpop.f32.mrf.mxu0
      %1298 = vmatprep.mubr.bf16.mxu0 0
      %1299 = vmatmul.mubr.bf16.gmra.mxu0 %v1081
      %v1300 = vpop.f32.mrf.mxu0
      %v1301 = vadd.f32 0.0, %v1300
      %v1302 = vpop.f32.mrf.mxu0
      %v1303 = vpop.f32.mrf.mxu0
      %v1304 = vadd.f32 0.0, %v1303
      %v1305 = vpop.f32.mrf.mxu0
      %1306 = vdwg.mxu0
      %v1307 = vadd.f32 %v905, %v1181
      %v1308 = vadd.f32 %v908, %v1184
      %v1309 = vadd.f32 %v913, %v1189
      %v1310 = vadd.f32 %v916, %v1192
      %v1311 = vadd.f32 %v921, %v1197
      %v1312 = vadd.f32 %v924, %v1200
      %v1313 = vadd.f32 %v929, %v1205
      %v1314 = vadd.f32 %v932, %v1208
      %v1315 = vadd.f32 %v937, %v1213
      %v1316 = vadd.f32 %v940, %v1216
      %v1317 = vadd.f32 %v945, %v1221
      %v1318 = vadd.f32 %v948, %v1224
      %v1319 = vadd.f32 %v953, %v1229
      %v1320 = vadd.f32 %v956, %v1232
      %v1321 = vadd.f32 %v961, %v1237
      %v1322 = vadd.f32 %v964, %v1240
      %v1323 = vadd.f32 %v969, %v1245
      %v1324 = vadd.f32 %v972, %v1248
      %v1325 = vadd.f32 %v977, %v1253
      %v1326 = vadd.f32 %v980, %v1256
      %v1327 = vadd.f32 %v985, %v1261
      %v1328 = vadd.f32 %v988, %v1264
      %v1329 = vadd.f32 %v993, %v1269
      %v1330 = vadd.f32 %v996, %v1272
      %v1331 = vadd.f32 %v1001, %v1277
      %v1332 = vadd.f32 %v1004, %v1280
      %v1333 = vadd.f32 %v1009, %v1285
      %v1334 = vadd.f32 %v1012, %v1288
      %v1335 = vadd.f32 %v1017, %v1293
      %v1336 = vadd.f32 %v1020, %v1296
      %v1337 = vadd.f32 %v1025, %v1301
      %v1338 = vadd.f32 %v1028, %v1304
      %s1339 = scalar_lea.vmem %s268, 192
      %v1340 = vld [vmem:[%s1339] sm:$0xf]
      %v1341 = vld [vmem:[%s1339 + $0x4] sm:$0xf]
      %v1342 = vld [vmem:[%s1339 + $0x8] sm:$0xf]
      %v1343 = vld [vmem:[%s1339 + $0xc] sm:$0xf]
      %v1344 = vld [vmem:[%s1339 + $0x10] sm:$0xf]
      %v1345 = vld [vmem:[%s1339 + $0x14] sm:$0xf]
      %v1346 = vld [vmem:[%s1339 + $0x18] sm:$0xf]
      %v1347 = vld [vmem:[%s1339 + $0x1c] sm:$0xf]
      %v1348 = vld [vmem:[%s1339 + $0x20] sm:$0xf]
      %v1349 = vld [vmem:[%s1339 + $0x24] sm:$0xf]
      %v1350 = vld [vmem:[%s1339 + $0x28] sm:$0xf]
      %v1351 = vld [vmem:[%s1339 + $0x2c] sm:$0xf]
      %v1352 = vld [vmem:[%s1339 + $0x30] sm:$0xf]
      %v1353 = vld [vmem:[%s1339 + $0x34] sm:$0xf]
      %v1354 = vld [vmem:[%s1339 + $0x38] sm:$0xf]
      %v1355 = vld [vmem:[%s1339 + $0x3c] sm:$0xf]
      %v1356 = vrot.slane %v429, 1
      %v1357 = vsel %vm1048, %v1080, %v1356
      %v1375 = vunpack.c.l.b16 %v1340
      %v1376 = vunpack.c.l.b16 %v1341
      %v1377 = vunpack.c.l.b16 %v1342
      %v1378 = vunpack.c.l.b16 %v1343
      %v1379 = vunpack.c.l.b16 %v1344
      %v1380 = vunpack.c.l.b16 %v1345
      %v1381 = vunpack.c.l.b16 %v1346
      %v1382 = vunpack.c.l.b16 %v1347
      %v1383 = vunpack.c.l.b16 %v1348
      %v1384 = vunpack.c.l.b16 %v1349
      %v1385 = vunpack.c.l.b16 %v1350
      %v1386 = vunpack.c.l.b16 %v1351
      %v1387 = vunpack.c.l.b16 %v1352
      %v1388 = vunpack.c.l.b16 %v1353
      %v1389 = vunpack.c.l.b16 %v1354
      %v1390 = vunpack.c.l.b16 %v1355
      %v1391 = vpack.c.b16 %v1376, %v1375
      %v1392 = vpack.c.b16 %v1378, %v1377
      %v1393 = vpack.c.b16 %v1380, %v1379
      %v1394 = vpack.c.b16 %v1382, %v1381
      %v1395 = vpack.c.b16 %v1384, %v1383
      %v1396 = vpack.c.b16 %v1386, %v1385
      %v1397 = vpack.c.b16 %v1388, %v1387
      %v1398 = vpack.c.b16 %v1390, %v1389
      %1407 = vmatprep.subr.bf16.mxu0 0
      %1408 = vmatpush1.bf16.msra.mxu0 %v1398
      %1409 = vmatprep.subr.bf16.mxu0 0
      %1410 = vmatpush1.bf16.msra.mxu0 %v1397
      %1411 = vmatprep.subr.bf16.mxu0 0
      %1412 = vmatpush1.bf16.msra.mxu0 %v1396
      %1413 = vmatprep.subr.bf16.mxu0 0
      %1414 = vmatpush1.bf16.msra.mxu0 %v1395
      %1415 = vmatprep.subr.bf16.mxu0 0
      %1416 = vmatpush1.bf16.msra.mxu0 %v1394
      %1417 = vmatprep.subr.bf16.mxu0 0
      %1418 = vmatpush1.bf16.msra.mxu0 %v1393
      %1419 = vmatprep.subr.bf16.mxu0 0
      %1420 = vmatpush1.bf16.msra.mxu0 %v1392
      %1421 = vmatprep.subr.bf16.mxu0 0
      %1422 = vmatpush1.bf16.msra.mxu0 %v1391
      %1423 = vmatprep.subr.bf16.mxu0 0
      %1424 = vmatpush2.bf16.msra.mxu0 0
      %1425 = vmatprep.subr.bf16.mxu0 0
      %1426 = vmatpush2.bf16.msra.mxu0 0
      %1427 = vmatprep.subr.bf16.mxu0 0
      %1428 = vmatpush2.bf16.msra.mxu0 0
      %1429 = vmatprep.subr.bf16.mxu0 0
      %1430 = vmatpush2.bf16.msra.mxu0 0
      %1431 = vmatprep.subr.bf16.mxu0 0
      %1432 = vmatpush2.bf16.msra.mxu0 0
      %1433 = vmatprep.subr.bf16.mxu0 0
      %1434 = vmatpush2.bf16.msra.mxu0 0
      %1435 = vmatprep.subr.bf16.mxu0 0
      %1436 = vmatpush2.bf16.msra.mxu0 0
      %1437 = vmatprep.subr.bf16.mxu0 0
      %1438 = vmatpush2.bf16.msra.mxu0 0
      %1439 = vmatprep.mubr.bf16.mxu0 0
      %1440 = vmatmul.mubr.bf16.gmra.mxu0 %v1053
      %v1441 = vpop.f32.mrf.mxu0
      %v1442 = vadd.f32 0.0, %v1441
      %v1443 = vpop.f32.mrf.mxu0
      %v1444 = vpop.f32.mrf.mxu0
      %v1445 = vadd.f32 0.0, %v1444
      %v1446 = vpop.f32.mrf.mxu0
      %1447 = vmatprep.mubr.bf16.mxu0 0
      %1448 = vmatmul.mubr.bf16.gmra.mxu0 %v1055
      %v1449 = vpop.f32.mrf.mxu0
      %v1450 = vadd.f32 0.0, %v1449
      %v1451 = vpop.f32.mrf.mxu0
      %v1452 = vpop.f32.mrf.mxu0
      %v1453 = vadd.f32 0.0, %v1452
      %v1454 = vpop.f32.mrf.mxu0
      %1455 = vmatprep.mubr.bf16.mxu0 0
      %1456 = vmatmul.mubr.bf16.gmra.mxu0 %v1057
      %v1457 = vpop.f32.mrf.mxu0
      %v1458 = vadd.f32 0.0, %v1457
      %v1459 = vpop.f32.mrf.mxu0
      %v1460 = vpop.f32.mrf.mxu0
      %v1461 = vadd.f32 0.0, %v1460
      %v1462 = vpop.f32.mrf.mxu0
      %1463 = vmatprep.mubr.bf16.mxu0 0
      %1464 = vmatmul.mubr.bf16.gmra.mxu0 %v1059
      %v1465 = vpop.f32.mrf.mxu0
      %v1466 = vadd.f32 0.0, %v1465
      %v1467 = vpop.f32.mrf.mxu0
      %v1468 = vpop.f32.mrf.mxu0
      %v1469 = vadd.f32 0.0, %v1468
      %v1470 = vpop.f32.mrf.mxu0
      %1471 = vmatprep.mubr.bf16.mxu0 0
      %1472 = vmatmul.mubr.bf16.gmra.mxu0 %v1061
      %v1473 = vpop.f32.mrf.mxu0
      %v1474 = vadd.f32 0.0, %v1473
      %v1475 = vpop.f32.mrf.mxu0
      %v1476 = vpop.f32.mrf.mxu0
      %v1477 = vadd.f32 0.0, %v1476
      %v1478 = vpop.f32.mrf.mxu0
      %1479 = vmatprep.mubr.bf16.mxu0 0
      %1480 = vmatmul.mubr.bf16.gmra.mxu0 %v1063
      %v1481 = vpop.f32.mrf.mxu0
      %v1482 = vadd.f32 0.0, %v1481
      %v1483 = vpop.f32.mrf.mxu0
      %v1484 = vpop.f32.mrf.mxu0
      %v1485 = vadd.f32 0.0, %v1484
      %v1486 = vpop.f32.mrf.mxu0
      %1487 = vmatprep.mubr.bf16.mxu0 0
      %1488 = vmatmul.mubr.bf16.gmra.mxu0 %v1065
      %v1489 = vpop.f32.mrf.mxu0
      %v1490 = vadd.f32 0.0, %v1489
      %v1491 = vpop.f32.mrf.mxu0
      %v1492 = vpop.f32.mrf.mxu0
      %v1493 = vadd.f32 0.0, %v1492
      %v1494 = vpop.f32.mrf.mxu0
      %1495 = vmatprep.mubr.bf16.mxu0 0
      %1496 = vmatmul.mubr.bf16.gmra.mxu0 %v1067
      %v1497 = vpop.f32.mrf.mxu0
      %v1498 = vadd.f32 0.0, %v1497
      %v1499 = vpop.f32.mrf.mxu0
      %v1500 = vpop.f32.mrf.mxu0
      %v1501 = vadd.f32 0.0, %v1500
      %v1502 = vpop.f32.mrf.mxu0
      %1503 = vmatprep.mubr.bf16.mxu0 0
      %1504 = vmatmul.mubr.bf16.gmra.mxu0 %v1069
      %v1505 = vpop.f32.mrf.mxu0
      %v1506 = vadd.f32 0.0, %v1505
      %v1507 = vpop.f32.mrf.mxu0
      %v1508 = vpop.f32.mrf.mxu0
      %v1509 = vadd.f32 0.0, %v1508
      %v1510 = vpop.f32.mrf.mxu0
      %1511 = vmatprep.mubr.bf16.mxu0 0
      %1512 = vmatmul.mubr.bf16.gmra.mxu0 %v1071
      %v1513 = vpop.f32.mrf.mxu0
      %v1514 = vadd.f32 0.0, %v1513
      %v1515 = vpop.f32.mrf.mxu0
      %v1516 = vpop.f32.mrf.mxu0
      %v1517 = vadd.f32 0.0, %v1516
      %v1518 = vpop.f32.mrf.mxu0
      %1519 = vmatprep.mubr.bf16.mxu0 0
      %1520 = vmatmul.mubr.bf16.gmra.mxu0 %v1073
      %v1521 = vpop.f32.mrf.mxu0
      %v1522 = vadd.f32 0.0, %v1521
      %v1523 = vpop.f32.mrf.mxu0
      %v1524 = vpop.f32.mrf.mxu0
      %v1525 = vadd.f32 0.0, %v1524
      %v1526 = vpop.f32.mrf.mxu0
      %1527 = vmatprep.mubr.bf16.mxu0 0
      %1528 = vmatmul.mubr.bf16.gmra.mxu0 %v1075
      %v1529 = vpop.f32.mrf.mxu0
      %v1530 = vadd.f32 0.0, %v1529
      %v1531 = vpop.f32.mrf.mxu0
      %v1532 = vpop.f32.mrf.mxu0
      %v1533 = vadd.f32 0.0, %v1532
      %v1534 = vpop.f32.mrf.mxu0
      %1535 = vmatprep.mubr.bf16.mxu0 0
      %1536 = vmatmul.mubr.bf16.gmra.mxu0 %v1077
      %v1537 = vpop.f32.mrf.mxu0
      %v1538 = vadd.f32 0.0, %v1537
      %v1539 = vpop.f32.mrf.mxu0
      %v1540 = vpop.f32.mrf.mxu0
      %v1541 = vadd.f32 0.0, %v1540
      %v1542 = vpop.f32.mrf.mxu0
      %1543 = vmatprep.mubr.bf16.mxu0 0
      %1544 = vmatmul.mubr.bf16.gmra.mxu0 %v1079
      %v1545 = vpop.f32.mrf.mxu0
      %v1546 = vadd.f32 0.0, %v1545
      %v1547 = vpop.f32.mrf.mxu0
      %v1548 = vpop.f32.mrf.mxu0
      %v1549 = vadd.f32 0.0, %v1548
      %v1550 = vpop.f32.mrf.mxu0
      %1551 = vmatprep.mubr.bf16.mxu0 0
      %1552 = vmatmul.mubr.bf16.gmra.mxu0 %v1081
      %v1553 = vpop.f32.mrf.mxu0
      %v1554 = vadd.f32 0.0, %v1553
      %v1555 = vpop.f32.mrf.mxu0
      %v1556 = vpop.f32.mrf.mxu0
      %v1557 = vadd.f32 0.0, %v1556
      %v1558 = vpop.f32.mrf.mxu0
      %1559 = vmatprep.mubr.bf16.mxu0 0
      %1560 = vmatmul.mubr.bf16.gmra.mxu0 %v1357
      %v1561 = vpop.f32.mrf.mxu0
      %v1562 = vadd.f32 0.0, %v1561
      %v1563 = vpop.f32.mrf.mxu0
      %v1564 = vpop.f32.mrf.mxu0
      %v1565 = vadd.f32 0.0, %v1564
      %v1566 = vpop.f32.mrf.mxu0
      %1567 = vdwg.mxu0
      %v1568 = vadd.f32 %v1307, %v1442
      %v1569 = vadd.f32 %v1308, %v1445
      %v1570 = vadd.f32 %v1309, %v1450
      %v1571 = vadd.f32 %v1310, %v1453
      %v1572 = vadd.f32 %v1311, %v1458
      %v1573 = vadd.f32 %v1312, %v1461
      %v1574 = vadd.f32 %v1313, %v1466
      %v1575 = vadd.f32 %v1314, %v1469
      %v1576 = vadd.f32 %v1315, %v1474
      %v1577 = vadd.f32 %v1316, %v1477
      %v1578 = vadd.f32 %v1317, %v1482
      %v1579 = vadd.f32 %v1318, %v1485
      %v1580 = vadd.f32 %v1319, %v1490
      %v1581 = vadd.f32 %v1320, %v1493
      %v1582 = vadd.f32 %v1321, %v1498
      %v1583 = vadd.f32 %v1322, %v1501
      %v1584 = vadd.f32 %v1323, %v1506
      %v1585 = vadd.f32 %v1324, %v1509
      %v1586 = vadd.f32 %v1325, %v1514
      %v1587 = vadd.f32 %v1326, %v1517
      %v1588 = vadd.f32 %v1327, %v1522
      %v1589 = vadd.f32 %v1328, %v1525
      %v1590 = vadd.f32 %v1329, %v1530
      %v1591 = vadd.f32 %v1330, %v1533
      %v1592 = vadd.f32 %v1331, %v1538
      %v1593 = vadd.f32 %v1332, %v1541
      %v1594 = vadd.f32 %v1333, %v1546
      %v1595 = vadd.f32 %v1334, %v1549
      %v1596 = vadd.f32 %v1335, %v1554
      %v1597 = vadd.f32 %v1336, %v1557
      %v1598 = vadd.f32 %v1337, %v1562
      %v1599 = vadd.f32 %v1338, %v1565
      %s1600 = scalar_lea.vmem %s268, 256
      %v1601 = vld [vmem:[%s1600] sm:$0xf]
      %v1602 = vld [vmem:[%s1600 + $0x4] sm:$0xf]
      %v1603 = vld [vmem:[%s1600 + $0x8] sm:$0xf]
      %v1604 = vld [vmem:[%s1600 + $0xc] sm:$0xf]
      %v1605 = vld [vmem:[%s1600 + $0x10] sm:$0xf]
      %v1606 = vld [vmem:[%s1600 + $0x14] sm:$0xf]
      %v1607 = vld [vmem:[%s1600 + $0x18] sm:$0xf]
      %v1608 = vld [vmem:[%s1600 + $0x1c] sm:$0xf]
      %v1609 = vld [vmem:[%s1600 + $0x20] sm:$0xf]
      %v1610 = vld [vmem:[%s1600 + $0x24] sm:$0xf]
      %v1611 = vld [vmem:[%s1600 + $0x28] sm:$0xf]
      %v1612 = vld [vmem:[%s1600 + $0x2c] sm:$0xf]
      %v1613 = vld [vmem:[%s1600 + $0x30] sm:$0xf]
      %v1614 = vld [vmem:[%s1600 + $0x34] sm:$0xf]
      %v1615 = vld [vmem:[%s1600 + $0x38] sm:$0xf]
      %v1616 = vld [vmem:[%s1600 + $0x3c] sm:$0xf]
      %vm1617 = vsmask.f32 6400
      %v1618 = vrot.slane %v477, 1
      %v1619 = vrot.slane %v473, 2
      %v1620 = vor.u32 %v1618, %v1619
      %v1621 = vrot.slane %v485, 1
      %v1622 = vrot.slane %v481, 2
      %v1623 = vor.u32 %v1621, %v1622
      %v1624 = vsel %vm1617, %v1620, %v1623
      %v1625 = vrot.slane %v493, 1
      %v1626 = vrot.slane %v489, 2
      %v1627 = vor.u32 %v1625, %v1626
      %v1628 = vsel %vm1617, %v1623, %v1627
      %v1629 = vrot.slane %v501, 1
      %v1630 = vrot.slane %v497, 2
      %v1631 = vor.u32 %v1629, %v1630
      %v1632 = vsel %vm1617, %v1627, %v1631
      %v1633 = vrot.slane %v509, 1
      %v1634 = vrot.slane %v505, 2
      %v1635 = vor.u32 %v1633, %v1634
      %v1636 = vsel %vm1617, %v1631, %v1635
      %v1637 = vrot.slane %v517, 1
      %v1638 = vrot.slane %v513, 2
      %v1639 = vor.u32 %v1637, %v1638
      %v1640 = vsel %vm1617, %v1635, %v1639
      %v1641 = vrot.slane %v525, 1
      %v1642 = vrot.slane %v521, 2
      %v1643 = vor.u32 %v1641, %v1642
      %v1644 = vsel %vm1617, %v1639, %v1643
      %v1645 = vrot.slane %v533, 1
      %v1646 = vrot.slane %v529, 2
      %v1647 = vor.u32 %v1645, %v1646
      %v1648 = vsel %vm1617, %v1643, %v1647
      %v1649 = vrot.slane %v541, 1
      %v1650 = vrot.slane %v537, 2
      %v1651 = vor.u32 %v1649, %v1650
      %v1652 = vsel %vm1617, %v1647, %v1651
      %v1653 = vrot.slane %v549, 1
      %v1654 = vrot.slane %v545, 2
      %v1655 = vor.u32 %v1653, %v1654
      %v1656 = vsel %vm1617, %v1651, %v1655
      %v1657 = vrot.slane %v557, 1
      %v1658 = vrot.slane %v553, 2
      %v1659 = vor.u32 %v1657, %v1658
      %v1660 = vsel %vm1617, %v1655, %v1659
      %v1661 = vrot.slane %v565, 1
      %v1662 = vrot.slane %v561, 2
      %v1663 = vor.u32 %v1661, %v1662
      %v1664 = vsel %vm1617, %v1659, %v1663
      %v1665 = vrot.slane %v573, 1
      %v1666 = vrot.slane %v569, 2
      %v1667 = vor.u32 %v1665, %v1666
      %v1668 = vsel %vm1617, %v1663, %v1667
      %v1669 = vrot.slane %v581, 1
      %v1670 = vrot.slane %v577, 2
      %v1671 = vor.u32 %v1669, %v1670
      %v1672 = vsel %vm1617, %v1667, %v1671
      %v1673 = vrot.slane %v589, 1
      %v1674 = vrot.slane %v585, 2
      %v1675 = vor.u32 %v1673, %v1674
      %v1676 = vsel %vm1617, %v1671, %v1675
      %v1677 = vshrl.u32 %v428, 16
      %v1679 = vrot.slane %v1677, 1
      %v1680 = vrot.slane %v593, 2
      %v1681 = vor.u32 %v1679, %v1680
      %v1682 = vsel %vm1617, %v1675, %v1681
      %v1684 = vshrl.u32 %v429, 16
      %v1686 = vrot.slane %v1684, 1
      %v1687 = vshll.u32 %v429, 16
      %v1689 = vrot.slane %v1687, 2
      %v1690 = vor.u32 %v1686, %v1689
      %v1691 = vsel %vm1617, %v1681, %v1690
      %v1724 = vunpack.c.l.b16 %v1601
      %v1725 = vunpack.c.l.b16 %v1602
      %v1726 = vunpack.c.l.b16 %v1603
      %v1727 = vunpack.c.l.b16 %v1604
      %v1728 = vunpack.c.l.b16 %v1605
      %v1729 = vunpack.c.l.b16 %v1606
      %v1730 = vunpack.c.l.b16 %v1607
      %v1731 = vunpack.c.l.b16 %v1608
      %v1732 = vunpack.c.l.b16 %v1609
      %v1733 = vunpack.c.l.b16 %v1610
      %v1734 = vunpack.c.l.b16 %v1611
      %v1735 = vunpack.c.l.b16 %v1612
      %v1736 = vunpack.c.l.b16 %v1613
      %v1737 = vunpack.c.l.b16 %v1614
      %v1738 = vunpack.c.l.b16 %v1615
      %v1739 = vunpack.c.l.b16 %v1616
      %v1740 = vpack.c.b16 %v1725, %v1724
      %v1741 = vpack.c.b16 %v1727, %v1726
      %v1742 = vpack.c.b16 %v1729, %v1728
      %v1743 = vpack.c.b16 %v1731, %v1730
      %v1744 = vpack.c.b16 %v1733, %v1732
      %v1745 = vpack.c.b16 %v1735, %v1734
      %v1746 = vpack.c.b16 %v1737, %v1736
      %v1747 = vpack.c.b16 %v1739, %v1738
      %1756 = vmatprep.subr.bf16.mxu0 0
      %1757 = vmatpush1.bf16.msra.mxu0 %v1747
      %1758 = vmatprep.subr.bf16.mxu0 0
      %1759 = vmatpush1.bf16.msra.mxu0 %v1746
      %1760 = vmatprep.subr.bf16.mxu0 0
      %1761 = vmatpush1.bf16.msra.mxu0 %v1745
      %1762 = vmatprep.subr.bf16.mxu0 0
      %1763 = vmatpush1.bf16.msra.mxu0 %v1744
      %1764 = vmatprep.subr.bf16.mxu0 0
      %1765 = vmatpush1.bf16.msra.mxu0 %v1743
      %1766 = vmatprep.subr.bf16.mxu0 0
      %1767 = vmatpush1.bf16.msra.mxu0 %v1742
      %1768 = vmatprep.subr.bf16.mxu0 0
      %1769 = vmatpush1.bf16.msra.mxu0 %v1741
      %1770 = vmatprep.subr.bf16.mxu0 0
      %1771 = vmatpush1.bf16.msra.mxu0 %v1740
      %1772 = vmatprep.subr.bf16.mxu0 0
      %1773 = vmatpush2.bf16.msra.mxu0 0
      %1774 = vmatprep.subr.bf16.mxu0 0
      %1775 = vmatpush2.bf16.msra.mxu0 0
      %1776 = vmatprep.subr.bf16.mxu0 0
      %1777 = vmatpush2.bf16.msra.mxu0 0
      %1778 = vmatprep.subr.bf16.mxu0 0
      %1779 = vmatpush2.bf16.msra.mxu0 0
      %1780 = vmatprep.subr.bf16.mxu0 0
      %1781 = vmatpush2.bf16.msra.mxu0 0
      %1782 = vmatprep.subr.bf16.mxu0 0
      %1783 = vmatpush2.bf16.msra.mxu0 0
      %1784 = vmatprep.subr.bf16.mxu0 0
      %1785 = vmatpush2.bf16.msra.mxu0 0
      %1786 = vmatprep.subr.bf16.mxu0 0
      %1787 = vmatpush2.bf16.msra.mxu0 0
      %1788 = vmatprep.mubr.bf16.mxu0 0
      %1789 = vmatmul.mubr.bf16.gmra.mxu0 %v1624
      %v1790 = vpop.f32.mrf.mxu0
      %v1791 = vadd.f32 0.0, %v1790
      %v1792 = vpop.f32.mrf.mxu0
      %v1793 = vpop.f32.mrf.mxu0
      %v1794 = vadd.f32 0.0, %v1793
      %v1795 = vpop.f32.mrf.mxu0
      %1796 = vmatprep.mubr.bf16.mxu0 0
      %1797 = vmatmul.mubr.bf16.gmra.mxu0 %v1628
      %v1798 = vpop.f32.mrf.mxu0
      %v1799 = vadd.f32 0.0, %v1798
      %v1800 = vpop.f32.mrf.mxu0
      %v1801 = vpop.f32.mrf.mxu0
      %v1802 = vadd.f32 0.0, %v1801
      %v1803 = vpop.f32.mrf.mxu0
      %1804 = vmatprep.mubr.bf16.mxu0 0
      %1805 = vmatmul.mubr.bf16.gmra.mxu0 %v1632
      %v1806 = vpop.f32.mrf.mxu0
      %v1807 = vadd.f32 0.0, %v1806
      %v1808 = vpop.f32.mrf.mxu0
      %v1809 = vpop.f32.mrf.mxu0
      %v1810 = vadd.f32 0.0, %v1809
      %v1811 = vpop.f32.mrf.mxu0
      %1812 = vmatprep.mubr.bf16.mxu0 0
      %1813 = vmatmul.mubr.bf16.gmra.mxu0 %v1636
      %v1814 = vpop.f32.mrf.mxu0
      %v1815 = vadd.f32 0.0, %v1814
      %v1816 = vpop.f32.mrf.mxu0
      %v1817 = vpop.f32.mrf.mxu0
      %v1818 = vadd.f32 0.0, %v1817
      %v1819 = vpop.f32.mrf.mxu0
      %1820 = vmatprep.mubr.bf16.mxu0 0
      %1821 = vmatmul.mubr.bf16.gmra.mxu0 %v1640
      %v1822 = vpop.f32.mrf.mxu0
      %v1823 = vadd.f32 0.0, %v1822
      %v1824 = vpop.f32.mrf.mxu0
      %v1825 = vpop.f32.mrf.mxu0
      %v1826 = vadd.f32 0.0, %v1825
      %v1827 = vpop.f32.mrf.mxu0
      %1828 = vmatprep.mubr.bf16.mxu0 0
      %1829 = vmatmul.mubr.bf16.gmra.mxu0 %v1644
      %v1830 = vpop.f32.mrf.mxu0
      %v1831 = vadd.f32 0.0, %v1830
      %v1832 = vpop.f32.mrf.mxu0
      %v1833 = vpop.f32.mrf.mxu0
      %v1834 = vadd.f32 0.0, %v1833
      %v1835 = vpop.f32.mrf.mxu0
      %1836 = vmatprep.mubr.bf16.mxu0 0
      %1837 = vmatmul.mubr.bf16.gmra.mxu0 %v1648
      %v1838 = vpop.f32.mrf.mxu0
      %v1839 = vadd.f32 0.0, %v1838
      %v1840 = vpop.f32.mrf.mxu0
      %v1841 = vpop.f32.mrf.mxu0
      %v1842 = vadd.f32 0.0, %v1841
      %v1843 = vpop.f32.mrf.mxu0
      %1844 = vmatprep.mubr.bf16.mxu0 0
      %1845 = vmatmul.mubr.bf16.gmra.mxu0 %v1652
      %v1846 = vpop.f32.mrf.mxu0
      %v1847 = vadd.f32 0.0, %v1846
      %v1848 = vpop.f32.mrf.mxu0
      %v1849 = vpop.f32.mrf.mxu0
      %v1850 = vadd.f32 0.0, %v1849
      %v1851 = vpop.f32.mrf.mxu0
      %1852 = vmatprep.mubr.bf16.mxu0 0
      %1853 = vmatmul.mubr.bf16.gmra.mxu0 %v1656
      %v1854 = vpop.f32.mrf.mxu0
      %v1855 = vadd.f32 0.0, %v1854
      %v1856 = vpop.f32.mrf.mxu0
      %v1857 = vpop.f32.mrf.mxu0
      %v1858 = vadd.f32 0.0, %v1857
      %v1859 = vpop.f32.mrf.mxu0
      %1860 = vmatprep.mubr.bf16.mxu0 0
      %1861 = vmatmul.mubr.bf16.gmra.mxu0 %v1660
      %v1862 = vpop.f32.mrf.mxu0
      %v1863 = vadd.f32 0.0, %v1862
      %v1864 = vpop.f32.mrf.mxu0
      %v1865 = vpop.f32.mrf.mxu0
      %v1866 = vadd.f32 0.0, %v1865
      %v1867 = vpop.f32.mrf.mxu0
      %1868 = vmatprep.mubr.bf16.mxu0 0
      %1869 = vmatmul.mubr.bf16.gmra.mxu0 %v1664
      %v1870 = vpop.f32.mrf.mxu0
      %v1871 = vadd.f32 0.0, %v1870
      %v1872 = vpop.f32.mrf.mxu0
      %v1873 = vpop.f32.mrf.mxu0
      %v1874 = vadd.f32 0.0, %v1873
      %v1875 = vpop.f32.mrf.mxu0
      %1876 = vmatprep.mubr.bf16.mxu0 0
      %1877 = vmatmul.mubr.bf16.gmra.mxu0 %v1668
      %v1878 = vpop.f32.mrf.mxu0
      %v1879 = vadd.f32 0.0, %v1878
      %v1880 = vpop.f32.mrf.mxu0
      %v1881 = vpop.f32.mrf.mxu0
      %v1882 = vadd.f32 0.0, %v1881
      %v1883 = vpop.f32.mrf.mxu0
      %1884 = vmatprep.mubr.bf16.mxu0 0
      %1885 = vmatmul.mubr.bf16.gmra.mxu0 %v1672
      %v1886 = vpop.f32.mrf.mxu0
      %v1887 = vadd.f32 0.0, %v1886
      %v1888 = vpop.f32.mrf.mxu0
      %v1889 = vpop.f32.mrf.mxu0
      %v1890 = vadd.f32 0.0, %v1889
      %v1891 = vpop.f32.mrf.mxu0
      %1892 = vmatprep.mubr.bf16.mxu0 0
      %1893 = vmatmul.mubr.bf16.gmra.mxu0 %v1676
      %v1894 = vpop.f32.mrf.mxu0
      %v1895 = vadd.f32 0.0, %v1894
      %v1896 = vpop.f32.mrf.mxu0
      %v1897 = vpop.f32.mrf.mxu0
      %v1898 = vadd.f32 0.0, %v1897
      %v1899 = vpop.f32.mrf.mxu0
      %1900 = vmatprep.mubr.bf16.mxu0 0
      %1901 = vmatmul.mubr.bf16.gmra.mxu0 %v1682
      %v1902 = vpop.f32.mrf.mxu0
      %v1903 = vadd.f32 0.0, %v1902
      %v1904 = vpop.f32.mrf.mxu0
      %v1905 = vpop.f32.mrf.mxu0
      %v1906 = vadd.f32 0.0, %v1905
      %v1907 = vpop.f32.mrf.mxu0
      %1908 = vmatprep.mubr.bf16.mxu0 0
      %1909 = vmatmul.mubr.bf16.gmra.mxu0 %v1691
      %v1910 = vpop.f32.mrf.mxu0
      %v1911 = vadd.f32 0.0, %v1910
      %v1912 = vpop.f32.mrf.mxu0
      %v1913 = vpop.f32.mrf.mxu0
      %v1914 = vadd.f32 0.0, %v1913
      %v1915 = vpop.f32.mrf.mxu0
      %1916 = vdwg.mxu0
      %v1917 = vadd.f32 %v1568, %v1791
      %v1918 = vadd.f32 %v1569, %v1794
      %v1919 = vadd.f32 %v1570, %v1799
      %v1920 = vadd.f32 %v1571, %v1802
      %v1921 = vadd.f32 %v1572, %v1807
      %v1922 = vadd.f32 %v1573, %v1810
      %v1923 = vadd.f32 %v1574, %v1815
      %v1924 = vadd.f32 %v1575, %v1818
      %v1925 = vadd.f32 %v1576, %v1823
      %v1926 = vadd.f32 %v1577, %v1826
      %v1927 = vadd.f32 %v1578, %v1831
      %v1928 = vadd.f32 %v1579, %v1834
      %v1929 = vadd.f32 %v1580, %v1839
      %v1930 = vadd.f32 %v1581, %v1842
      %v1931 = vadd.f32 %v1582, %v1847
      %v1932 = vadd.f32 %v1583, %v1850
      %v1933 = vadd.f32 %v1584, %v1855
      %v1934 = vadd.f32 %v1585, %v1858
      %v1935 = vadd.f32 %v1586, %v1863
      %v1936 = vadd.f32 %v1587, %v1866
      %v1937 = vadd.f32 %v1588, %v1871
      %v1938 = vadd.f32 %v1589, %v1874
      %v1939 = vadd.f32 %v1590, %v1879
      %v1940 = vadd.f32 %v1591, %v1882
      %v1941 = vadd.f32 %v1592, %v1887
      %v1942 = vadd.f32 %v1593, %v1890
      %v1943 = vadd.f32 %v1594, %v1895
      %v1944 = vadd.f32 %v1595, %v1898
      %v1945 = vadd.f32 %v1596, %v1903
      %v1946 = vadd.f32 %v1597, %v1906
      %v1947 = vadd.f32 %v1598, %v1911
      %v1948 = vadd.f32 %v1599, %v1914
      %s1949 = scalar_lea.vmem %s268, 320
      %v1950 = vld [vmem:[%s1949] sm:$0xf]
      %v1951 = vld [vmem:[%s1949 + $0x4] sm:$0xf]
      %v1952 = vld [vmem:[%s1949 + $0x8] sm:$0xf]
      %v1953 = vld [vmem:[%s1949 + $0xc] sm:$0xf]
      %v1954 = vld [vmem:[%s1949 + $0x10] sm:$0xf]
      %v1955 = vld [vmem:[%s1949 + $0x14] sm:$0xf]
      %v1956 = vld [vmem:[%s1949 + $0x18] sm:$0xf]
      %v1957 = vld [vmem:[%s1949 + $0x1c] sm:$0xf]
      %v1958 = vld [vmem:[%s1949 + $0x20] sm:$0xf]
      %v1959 = vld [vmem:[%s1949 + $0x24] sm:$0xf]
      %v1960 = vld [vmem:[%s1949 + $0x28] sm:$0xf]
      %v1961 = vld [vmem:[%s1949 + $0x2c] sm:$0xf]
      %v1962 = vld [vmem:[%s1949 + $0x30] sm:$0xf]
      %v1963 = vld [vmem:[%s1949 + $0x34] sm:$0xf]
      %v1964 = vld [vmem:[%s1949 + $0x38] sm:$0xf]
      %v1965 = vld [vmem:[%s1949 + $0x3c] sm:$0xf]
      %vm1966 = vcmask 1045504
      %v1967 = vrot.slane %v385, 2
      %v1968 = vrot.slane %v386, 2
      %v1969 = vsel %vm1966, %v1967, %v1968
      %v1970 = vrot.slane %v387, 2
      %v1971 = vsel %vm1966, %v1968, %v1970
      %v1972 = vrot.slane %v388, 2
      %v1973 = vsel %vm1966, %v1970, %v1972
      %v1974 = vrot.slane %v389, 2
      %v1975 = vsel %vm1966, %v1972, %v1974
      %v1976 = vrot.slane %v390, 2
      %v1977 = vsel %vm1966, %v1974, %v1976
      %v1978 = vrot.slane %v391, 2
      %v1979 = vsel %vm1966, %v1976, %v1978
      %v1980 = vrot.slane %v392, 2
      %v1981 = vsel %vm1966, %v1978, %v1980
      %v1982 = vrot.slane %v393, 2
      %v1983 = vsel %vm1966, %v1980, %v1982
      %v1984 = vrot.slane %v394, 2
      %v1985 = vsel %vm1966, %v1982, %v1984
      %v1986 = vrot.slane %v395, 2
      %v1987 = vsel %vm1966, %v1984, %v1986
      %v1988 = vrot.slane %v396, 2
      %v1989 = vsel %vm1966, %v1986, %v1988
      %v1990 = vrot.slane %v397, 2
      %v1991 = vsel %vm1966, %v1988, %v1990
      %v1992 = vrot.slane %v398, 2
      %v1993 = vsel %vm1966, %v1990, %v1992
      %v1994 = vrot.slane %v399, 2
      %v1995 = vsel %vm1966, %v1992, %v1994
      %v1996 = vrot.slane %v428, 2
      %v1997 = vsel %vm1966, %v1994, %v1996
      %v1998 = vrot.slane %v429, 2
      %v1999 = vsel %vm1966, %v1996, %v1998
      %v2032 = vunpack.c.l.b16 %v1950
      %v2033 = vunpack.c.l.b16 %v1951
      %v2034 = vunpack.c.l.b16 %v1952
      %v2035 = vunpack.c.l.b16 %v1953
      %v2036 = vunpack.c.l.b16 %v1954
      %v2037 = vunpack.c.l.b16 %v1955
      %v2038 = vunpack.c.l.b16 %v1956
      %v2039 = vunpack.c.l.b16 %v1957
      %v2040 = vunpack.c.l.b16 %v1958
      %v2041 = vunpack.c.l.b16 %v1959
      %v2042 = vunpack.c.l.b16 %v1960
      %v2043 = vunpack.c.l.b16 %v1961
      %v2044 = vunpack.c.l.b16 %v1962
      %v2045 = vunpack.c.l.b16 %v1963
      %v2046 = vunpack.c.l.b16 %v1964
      %v2047 = vunpack.c.l.b16 %v1965
      %v2048 = vpack.c.b16 %v2033, %v2032
      %v2049 = vpack.c.b16 %v2035, %v2034
      %v2050 = vpack.c.b16 %v2037, %v2036
      %v2051 = vpack.c.b16 %v2039, %v2038
      %v2052 = vpack.c.b16 %v2041, %v2040
      %v2053 = vpack.c.b16 %v2043, %v2042
      %v2054 = vpack.c.b16 %v2045, %v2044
      %v2055 = vpack.c.b16 %v2047, %v2046
      %2064 = vmatprep.subr.bf16.mxu0 0
      %2065 = vmatpush1.bf16.msra.mxu0 %v2055
      %2066 = vmatprep.subr.bf16.mxu0 0
      %2067 = vmatpush1.bf16.msra.mxu0 %v2054
      %2068 = vmatprep.subr.bf16.mxu0 0
      %2069 = vmatpush1.bf16.msra.mxu0 %v2053
      %2070 = vmatprep.subr.bf16.mxu0 0
      %2071 = vmatpush1.bf16.msra.mxu0 %v2052
      %2072 = vmatprep.subr.bf16.mxu0 0
      %2073 = vmatpush1.bf16.msra.mxu0 %v2051
      %2074 = vmatprep.subr.bf16.mxu0 0
      %2075 = vmatpush1.bf16.msra.mxu0 %v2050
      %2076 = vmatprep.subr.bf16.mxu0 0
      %2077 = vmatpush1.bf16.msra.mxu0 %v2049
      %2078 = vmatprep.subr.bf16.mxu0 0
      %2079 = vmatpush1.bf16.msra.mxu0 %v2048
      %2080 = vmatprep.subr.bf16.mxu0 0
      %2081 = vmatpush2.bf16.msra.mxu0 0
      %2082 = vmatprep.subr.bf16.mxu0 0
      %2083 = vmatpush2.bf16.msra.mxu0 0
      %2084 = vmatprep.subr.bf16.mxu0 0
      %2085 = vmatpush2.bf16.msra.mxu0 0
      %2086 = vmatprep.subr.bf16.mxu0 0
      %2087 = vmatpush2.bf16.msra.mxu0 0
      %2088 = vmatprep.subr.bf16.mxu0 0
      %2089 = vmatpush2.bf16.msra.mxu0 0
      %2090 = vmatprep.subr.bf16.mxu0 0
      %2091 = vmatpush2.bf16.msra.mxu0 0
      %2092 = vmatprep.subr.bf16.mxu0 0
      %2093 = vmatpush2.bf16.msra.mxu0 0
      %2094 = vmatprep.subr.bf16.mxu0 0
      %2095 = vmatpush2.bf16.msra.mxu0 0
      %2096 = vmatprep.mubr.bf16.mxu0 0
      %2097 = vmatmul.mubr.bf16.gmra.mxu0 %v1969
      %v2098 = vpop.f32.mrf.mxu0
      %v2099 = vadd.f32 0.0, %v2098
      %v2100 = vpop.f32.mrf.mxu0
      %v2101 = vpop.f32.mrf.mxu0
      %v2102 = vadd.f32 0.0, %v2101
      %v2103 = vpop.f32.mrf.mxu0
      %2104 = vmatprep.mubr.bf16.mxu0 0
      %2105 = vmatmul.mubr.bf16.gmra.mxu0 %v1971
      %v2106 = vpop.f32.mrf.mxu0
      %v2107 = vadd.f32 0.0, %v2106
      %v2108 = vpop.f32.mrf.mxu0
      %v2109 = vpop.f32.mrf.mxu0
      %v2110 = vadd.f32 0.0, %v2109
      %v2111 = vpop.f32.mrf.mxu0
      %2112 = vmatprep.mubr.bf16.mxu0 0
      %2113 = vmatmul.mubr.bf16.gmra.mxu0 %v1973
      %v2114 = vpop.f32.mrf.mxu0
      %v2115 = vadd.f32 0.0, %v2114
      %v2116 = vpop.f32.mrf.mxu0
      %v2117 = vpop.f32.mrf.mxu0
      %v2118 = vadd.f32 0.0, %v2117
      %v2119 = vpop.f32.mrf.mxu0
      %2120 = vmatprep.mubr.bf16.mxu0 0
      %2121 = vmatmul.mubr.bf16.gmra.mxu0 %v1975
      %v2122 = vpop.f32.mrf.mxu0
      %v2123 = vadd.f32 0.0, %v2122
      %v2124 = vpop.f32.mrf.mxu0
      %v2125 = vpop.f32.mrf.mxu0
      %v2126 = vadd.f32 0.0, %v2125
      %v2127 = vpop.f32.mrf.mxu0
      %2128 = vmatprep.mubr.bf16.mxu0 0
      %2129 = vmatmul.mubr.bf16.gmra.mxu0 %v1977
      %v2130 = vpop.f32.mrf.mxu0
      %v2131 = vadd.f32 0.0, %v2130
      %v2132 = vpop.f32.mrf.mxu0
      %v2133 = vpop.f32.mrf.mxu0
      %v2134 = vadd.f32 0.0, %v2133
      %v2135 = vpop.f32.mrf.mxu0
      %2136 = vmatprep.mubr.bf16.mxu0 0
      %2137 = vmatmul.mubr.bf16.gmra.mxu0 %v1979
      %v2138 = vpop.f32.mrf.mxu0
      %v2139 = vadd.f32 0.0, %v2138
      %v2140 = vpop.f32.mrf.mxu0
      %v2141 = vpop.f32.mrf.mxu0
      %v2142 = vadd.f32 0.0, %v2141
      %v2143 = vpop.f32.mrf.mxu0
      %2144 = vmatprep.mubr.bf16.mxu0 0
      %2145 = vmatmul.mubr.bf16.gmra.mxu0 %v1981
      %v2146 = vpop.f32.mrf.mxu0
      %v2147 = vadd.f32 0.0, %v2146
      %v2148 = vpop.f32.mrf.mxu0
      %v2149 = vpop.f32.mrf.mxu0
      %v2150 = vadd.f32 0.0, %v2149
      %v2151 = vpop.f32.mrf.mxu0
      %2152 = vmatprep.mubr.bf16.mxu0 0
      %2153 = vmatmul.mubr.bf16.gmra.mxu0 %v1983
      %v2154 = vpop.f32.mrf.mxu0
      %v2155 = vadd.f32 0.0, %v2154
      %v2156 = vpop.f32.mrf.mxu0
      %v2157 = vpop.f32.mrf.mxu0
      %v2158 = vadd.f32 0.0, %v2157
      %v2159 = vpop.f32.mrf.mxu0
      %2160 = vmatprep.mubr.bf16.mxu0 0
      %2161 = vmatmul.mubr.bf16.gmra.mxu0 %v1985
      %v2162 = vpop.f32.mrf.mxu0
      %v2163 = vadd.f32 0.0, %v2162
      %v2164 = vpop.f32.mrf.mxu0
      %v2165 = vpop.f32.mrf.mxu0
      %v2166 = vadd.f32 0.0, %v2165
      %v2167 = vpop.f32.mrf.mxu0
      %2168 = vmatprep.mubr.bf16.mxu0 0
      %2169 = vmatmul.mubr.bf16.gmra.mxu0 %v1987
      %v2170 = vpop.f32.mrf.mxu0
      %v2171 = vadd.f32 0.0, %v2170
      %v2172 = vpop.f32.mrf.mxu0
      %v2173 = vpop.f32.mrf.mxu0
      %v2174 = vadd.f32 0.0, %v2173
      %v2175 = vpop.f32.mrf.mxu0
      %2176 = vmatprep.mubr.bf16.mxu0 0
      %2177 = vmatmul.mubr.bf16.gmra.mxu0 %v1989
      %v2178 = vpop.f32.mrf.mxu0
      %v2179 = vadd.f32 0.0, %v2178
      %v2180 = vpop.f32.mrf.mxu0
      %v2181 = vpop.f32.mrf.mxu0
      %v2182 = vadd.f32 0.0, %v2181
      %v2183 = vpop.f32.mrf.mxu0
      %2184 = vmatprep.mubr.bf16.mxu0 0
      %2185 = vmatmul.mubr.bf16.gmra.mxu0 %v1991
      %v2186 = vpop.f32.mrf.mxu0
      %v2187 = vadd.f32 0.0, %v2186
      %v2188 = vpop.f32.mrf.mxu0
      %v2189 = vpop.f32.mrf.mxu0
      %v2190 = vadd.f32 0.0, %v2189
      %v2191 = vpop.f32.mrf.mxu0
      %2192 = vmatprep.mubr.bf16.mxu0 0
      %2193 = vmatmul.mubr.bf16.gmra.mxu0 %v1993
      %v2194 = vpop.f32.mrf.mxu0
      %v2195 = vadd.f32 0.0, %v2194
      %v2196 = vpop.f32.mrf.mxu0
      %v2197 = vpop.f32.mrf.mxu0
      %v2198 = vadd.f32 0.0, %v2197
      %v2199 = vpop.f32.mrf.mxu0
      %2200 = vmatprep.mubr.bf16.mxu0 0
      %2201 = vmatmul.mubr.bf16.gmra.mxu0 %v1995
      %v2202 = vpop.f32.mrf.mxu0
      %v2203 = vadd.f32 0.0, %v2202
      %v2204 = vpop.f32.mrf.mxu0
      %v2205 = vpop.f32.mrf.mxu0
      %v2206 = vadd.f32 0.0, %v2205
      %v2207 = vpop.f32.mrf.mxu0
      %2208 = vmatprep.mubr.bf16.mxu0 0
      %2209 = vmatmul.mubr.bf16.gmra.mxu0 %v1997
      %v2210 = vpop.f32.mrf.mxu0
      %v2211 = vadd.f32 0.0, %v2210
      %v2212 = vpop.f32.mrf.mxu0
      %v2213 = vpop.f32.mrf.mxu0
      %v2214 = vadd.f32 0.0, %v2213
      %v2215 = vpop.f32.mrf.mxu0
      %2216 = vmatprep.mubr.bf16.mxu0 0
      %2217 = vmatmul.mubr.bf16.gmra.mxu0 %v1999
      %v2218 = vpop.f32.mrf.mxu0
      %v2219 = vadd.f32 0.0, %v2218
      %v2220 = vpop.f32.mrf.mxu0
      %v2221 = vpop.f32.mrf.mxu0
      %v2222 = vadd.f32 0.0, %v2221
      %v2223 = vpop.f32.mrf.mxu0
      %2224 = vdwg.mxu0
      %v2225 = vadd.f32 %v1917, %v2099
      %v2226 = vadd.f32 %v1918, %v2102
      %v2227 = vadd.f32 %v1919, %v2107
      %v2228 = vadd.f32 %v1920, %v2110
      %v2229 = vadd.f32 %v1921, %v2115
      %v2230 = vadd.f32 %v1922, %v2118
      %v2231 = vadd.f32 %v1923, %v2123
      %v2232 = vadd.f32 %v1924, %v2126
      %v2233 = vadd.f32 %v1925, %v2131
      %v2234 = vadd.f32 %v1926, %v2134
      %v2235 = vadd.f32 %v1927, %v2139
      %v2236 = vadd.f32 %v1928, %v2142
      %v2237 = vadd.f32 %v1929, %v2147
      %v2238 = vadd.f32 %v1930, %v2150
      %v2239 = vadd.f32 %v1931, %v2155
      %v2240 = vadd.f32 %v1932, %v2158
      %v2241 = vadd.f32 %v1933, %v2163
      %v2242 = vadd.f32 %v1934, %v2166
      %v2243 = vadd.f32 %v1935, %v2171
      %v2244 = vadd.f32 %v1936, %v2174
      %v2245 = vadd.f32 %v1937, %v2179
      %v2246 = vadd.f32 %v1938, %v2182
      %v2247 = vadd.f32 %v1939, %v2187
      %v2248 = vadd.f32 %v1940, %v2190
      %v2249 = vadd.f32 %v1941, %v2195
      %v2250 = vadd.f32 %v1942, %v2198
      %v2251 = vadd.f32 %v1943, %v2203
      %v2252 = vadd.f32 %v1944, %v2206
      %v2253 = vadd.f32 %v1945, %v2211
      %v2254 = vadd.f32 %v1946, %v2214
      %v2255 = vadd.f32 %v1947, %v2219
      %v2256 = vadd.f32 %v1948, %v2222
      %s2257 = scalar_lea.vmem %s268, 384
      %v2258 = vld [vmem:[%s2257] sm:$0xf]
      %v2259 = vld [vmem:[%s2257 + $0x4] sm:$0xf]
      %v2260 = vld [vmem:[%s2257 + $0x8] sm:$0xf]
      %v2261 = vld [vmem:[%s2257 + $0xc] sm:$0xf]
      %v2262 = vld [vmem:[%s2257 + $0x10] sm:$0xf]
      %v2263 = vld [vmem:[%s2257 + $0x14] sm:$0xf]
      %v2264 = vld [vmem:[%s2257 + $0x18] sm:$0xf]
      %v2265 = vld [vmem:[%s2257 + $0x1c] sm:$0xf]
      %v2266 = vld [vmem:[%s2257 + $0x20] sm:$0xf]
      %v2267 = vld [vmem:[%s2257 + $0x24] sm:$0xf]
      %v2268 = vld [vmem:[%s2257 + $0x28] sm:$0xf]
      %v2269 = vld [vmem:[%s2257 + $0x2c] sm:$0xf]
      %v2270 = vld [vmem:[%s2257 + $0x30] sm:$0xf]
      %v2271 = vld [vmem:[%s2257 + $0x34] sm:$0xf]
      %v2272 = vld [vmem:[%s2257 + $0x38] sm:$0xf]
      %v2273 = vld [vmem:[%s2257 + $0x3c] sm:$0xf]
      %v2274 = vrot.slane %v430, 2
      %v2275 = vsel %vm1966, %v1998, %v2274
      %v2293 = vunpack.c.l.b16 %v2258
      %v2294 = vunpack.c.l.b16 %v2259
      %v2295 = vunpack.c.l.b16 %v2260
      %v2296 = vunpack.c.l.b16 %v2261
      %v2297 = vunpack.c.l.b16 %v2262
      %v2298 = vunpack.c.l.b16 %v2263
      %v2299 = vunpack.c.l.b16 %v2264
      %v2300 = vunpack.c.l.b16 %v2265
      %v2301 = vunpack.c.l.b16 %v2266
      %v2302 = vunpack.c.l.b16 %v2267
      %v2303 = vunpack.c.l.b16 %v2268
      %v2304 = vunpack.c.l.b16 %v2269
      %v2305 = vunpack.c.l.b16 %v2270
      %v2306 = vunpack.c.l.b16 %v2271
      %v2307 = vunpack.c.l.b16 %v2272
      %v2308 = vunpack.c.l.b16 %v2273
      %v2309 = vpack.c.b16 %v2294, %v2293
      %v2310 = vpack.c.b16 %v2296, %v2295
      %v2311 = vpack.c.b16 %v2298, %v2297
      %v2312 = vpack.c.b16 %v2300, %v2299
      %v2313 = vpack.c.b16 %v2302, %v2301
      %v2314 = vpack.c.b16 %v2304, %v2303
      %v2315 = vpack.c.b16 %v2306, %v2305
      %v2316 = vpack.c.b16 %v2308, %v2307
      %2325 = vmatprep.subr.bf16.mxu0 0
      %2326 = vmatpush1.bf16.msra.mxu0 %v2316
      %2327 = vmatprep.subr.bf16.mxu0 0
      %2328 = vmatpush1.bf16.msra.mxu0 %v2315
      %2329 = vmatprep.subr.bf16.mxu0 0
      %2330 = vmatpush1.bf16.msra.mxu0 %v2314
      %2331 = vmatprep.subr.bf16.mxu0 0
      %2332 = vmatpush1.bf16.msra.mxu0 %v2313
      %2333 = vmatprep.subr.bf16.mxu0 0
      %2334 = vmatpush1.bf16.msra.mxu0 %v2312
      %2335 = vmatprep.subr.bf16.mxu0 0
      %2336 = vmatpush1.bf16.msra.mxu0 %v2311
      %2337 = vmatprep.subr.bf16.mxu0 0
      %2338 = vmatpush1.bf16.msra.mxu0 %v2310
      %2339 = vmatprep.subr.bf16.mxu0 0
      %2340 = vmatpush1.bf16.msra.mxu0 %v2309
      %2341 = vmatprep.subr.bf16.mxu0 0
      %2342 = vmatpush2.bf16.msra.mxu0 0
      %2343 = vmatprep.subr.bf16.mxu0 0
      %2344 = vmatpush2.bf16.msra.mxu0 0
      %2345 = vmatprep.subr.bf16.mxu0 0
      %2346 = vmatpush2.bf16.msra.mxu0 0
      %2347 = vmatprep.subr.bf16.mxu0 0
      %2348 = vmatpush2.bf16.msra.mxu0 0
      %2349 = vmatprep.subr.bf16.mxu0 0
      %2350 = vmatpush2.bf16.msra.mxu0 0
      %2351 = vmatprep.subr.bf16.mxu0 0
      %2352 = vmatpush2.bf16.msra.mxu0 0
      %2353 = vmatprep.subr.bf16.mxu0 0
      %2354 = vmatpush2.bf16.msra.mxu0 0
      %2355 = vmatprep.subr.bf16.mxu0 0
      %2356 = vmatpush2.bf16.msra.mxu0 0
      %2357 = vmatprep.mubr.bf16.mxu0 0
      %2358 = vmatmul.mubr.bf16.gmra.mxu0 %v1971
      %v2359 = vpop.f32.mrf.mxu0
      %v2360 = vadd.f32 0.0, %v2359
      %v2361 = vpop.f32.mrf.mxu0
      %v2362 = vpop.f32.mrf.mxu0
      %v2363 = vadd.f32 0.0, %v2362
      %v2364 = vpop.f32.mrf.mxu0
      %2365 = vmatprep.mubr.bf16.mxu0 0
      %2366 = vmatmul.mubr.bf16.gmra.mxu0 %v1973
      %v2367 = vpop.f32.mrf.mxu0
      %v2368 = vadd.f32 0.0, %v2367
      %v2369 = vpop.f32.mrf.mxu0
      %v2370 = vpop.f32.mrf.mxu0
      %v2371 = vadd.f32 0.0, %v2370
      %v2372 = vpop.f32.mrf.mxu0
      %2373 = vmatprep.mubr.bf16.mxu0 0
      %2374 = vmatmul.mubr.bf16.gmra.mxu0 %v1975
      %v2375 = vpop.f32.mrf.mxu0
      %v2376 = vadd.f32 0.0, %v2375
      %v2377 = vpop.f32.mrf.mxu0
      %v2378 = vpop.f32.mrf.mxu0
      %v2379 = vadd.f32 0.0, %v2378
      %v2380 = vpop.f32.mrf.mxu0
      %2381 = vmatprep.mubr.bf16.mxu0 0
      %2382 = vmatmul.mubr.bf16.gmra.mxu0 %v1977
      %v2383 = vpop.f32.mrf.mxu0
      %v2384 = vadd.f32 0.0, %v2383
      %v2385 = vpop.f32.mrf.mxu0
      %v2386 = vpop.f32.mrf.mxu0
      %v2387 = vadd.f32 0.0, %v2386
      %v2388 = vpop.f32.mrf.mxu0
      %2389 = vmatprep.mubr.bf16.mxu0 0
      %2390 = vmatmul.mubr.bf16.gmra.mxu0 %v1979
      %v2391 = vpop.f32.mrf.mxu0
      %v2392 = vadd.f32 0.0, %v2391
      %v2393 = vpop.f32.mrf.mxu0
      %v2394 = vpop.f32.mrf.mxu0
      %v2395 = vadd.f32 0.0, %v2394
      %v2396 = vpop.f32.mrf.mxu0
      %2397 = vmatprep.mubr.bf16.mxu0 0
      %2398 = vmatmul.mubr.bf16.gmra.mxu0 %v1981
      %v2399 = vpop.f32.mrf.mxu0
      %v2400 = vadd.f32 0.0, %v2399
      %v2401 = vpop.f32.mrf.mxu0
      %v2402 = vpop.f32.mrf.mxu0
      %v2403 = vadd.f32 0.0, %v2402
      %v2404 = vpop.f32.mrf.mxu0
      %2405 = vmatprep.mubr.bf16.mxu0 0
      %2406 = vmatmul.mubr.bf16.gmra.mxu0 %v1983
      %v2407 = vpop.f32.mrf.mxu0
      %v2408 = vadd.f32 0.0, %v2407
      %v2409 = vpop.f32.mrf.mxu0
      %v2410 = vpop.f32.mrf.mxu0
      %v2411 = vadd.f32 0.0, %v2410
      %v2412 = vpop.f32.mrf.mxu0
      %2413 = vmatprep.mubr.bf16.mxu0 0
      %2414 = vmatmul.mubr.bf16.gmra.mxu0 %v1985
      %v2415 = vpop.f32.mrf.mxu0
      %v2416 = vadd.f32 0.0, %v2415
      %v2417 = vpop.f32.mrf.mxu0
      %v2418 = vpop.f32.mrf.mxu0
      %v2419 = vadd.f32 0.0, %v2418
      %v2420 = vpop.f32.mrf.mxu0
      %2421 = vmatprep.mubr.bf16.mxu0 0
      %2422 = vmatmul.mubr.bf16.gmra.mxu0 %v1987
      %v2423 = vpop.f32.mrf.mxu0
      %v2424 = vadd.f32 0.0, %v2423
      %v2425 = vpop.f32.mrf.mxu0
      %v2426 = vpop.f32.mrf.mxu0
      %v2427 = vadd.f32 0.0, %v2426
      %v2428 = vpop.f32.mrf.mxu0
      %2429 = vmatprep.mubr.bf16.mxu0 0
      %2430 = vmatmul.mubr.bf16.gmra.mxu0 %v1989
      %v2431 = vpop.f32.mrf.mxu0
      %v2432 = vadd.f32 0.0, %v2431
      %v2433 = vpop.f32.mrf.mxu0
      %v2434 = vpop.f32.mrf.mxu0
      %v2435 = vadd.f32 0.0, %v2434
      %v2436 = vpop.f32.mrf.mxu0
      %2437 = vmatprep.mubr.bf16.mxu0 0
      %2438 = vmatmul.mubr.bf16.gmra.mxu0 %v1991
      %v2439 = vpop.f32.mrf.mxu0
      %v2440 = vadd.f32 0.0, %v2439
      %v2441 = vpop.f32.mrf.mxu0
      %v2442 = vpop.f32.mrf.mxu0
      %v2443 = vadd.f32 0.0, %v2442
      %v2444 = vpop.f32.mrf.mxu0
      %2445 = vmatprep.mubr.bf16.mxu0 0
      %2446 = vmatmul.mubr.bf16.gmra.mxu0 %v1993
      %v2447 = vpop.f32.mrf.mxu0
      %v2448 = vadd.f32 0.0, %v2447
      %v2449 = vpop.f32.mrf.mxu0
      %v2450 = vpop.f32.mrf.mxu0
      %v2451 = vadd.f32 0.0, %v2450
      %v2452 = vpop.f32.mrf.mxu0
      %2453 = vmatprep.mubr.bf16.mxu0 0
      %2454 = vmatmul.mubr.bf16.gmra.mxu0 %v1995
      %v2455 = vpop.f32.mrf.mxu0
      %v2456 = vadd.f32 0.0, %v2455
      %v2457 = vpop.f32.mrf.mxu0
      %v2458 = vpop.f32.mrf.mxu0
      %v2459 = vadd.f32 0.0, %v2458
      %v2460 = vpop.f32.mrf.mxu0
      %2461 = vmatprep.mubr.bf16.mxu0 0
      %2462 = vmatmul.mubr.bf16.gmra.mxu0 %v1997
      %v2463 = vpop.f32.mrf.mxu0
      %v2464 = vadd.f32 0.0, %v2463
      %v2465 = vpop.f32.mrf.mxu0
      %v2466 = vpop.f32.mrf.mxu0
      %v2467 = vadd.f32 0.0, %v2466
      %v2468 = vpop.f32.mrf.mxu0
      %2469 = vmatprep.mubr.bf16.mxu0 0
      %2470 = vmatmul.mubr.bf16.gmra.mxu0 %v1999
      %v2471 = vpop.f32.mrf.mxu0
      %v2472 = vadd.f32 0.0, %v2471
      %v2473 = vpop.f32.mrf.mxu0
      %v2474 = vpop.f32.mrf.mxu0
      %v2475 = vadd.f32 0.0, %v2474
      %v2476 = vpop.f32.mrf.mxu0
      %2477 = vmatprep.mubr.bf16.mxu0 0
      %2478 = vmatmul.mubr.bf16.gmra.mxu0 %v2275
      %v2479 = vpop.f32.mrf.mxu0
      %v2480 = vadd.f32 0.0, %v2479
      %v2481 = vpop.f32.mrf.mxu0
      %v2482 = vpop.f32.mrf.mxu0
      %v2483 = vadd.f32 0.0, %v2482
      %v2484 = vpop.f32.mrf.mxu0
      %2485 = vdwg.mxu0
      %v2486 = vadd.f32 %v2225, %v2360
      %v2487 = vadd.f32 %v2226, %v2363
      %v2488 = vadd.f32 %v2227, %v2368
      %v2489 = vadd.f32 %v2228, %v2371
      %v2490 = vadd.f32 %v2229, %v2376
      %v2491 = vadd.f32 %v2230, %v2379
      %v2492 = vadd.f32 %v2231, %v2384
      %v2493 = vadd.f32 %v2232, %v2387
      %v2494 = vadd.f32 %v2233, %v2392
      %v2495 = vadd.f32 %v2234, %v2395
      %v2496 = vadd.f32 %v2235, %v2400
      %v2497 = vadd.f32 %v2236, %v2403
      %v2498 = vadd.f32 %v2237, %v2408
      %v2499 = vadd.f32 %v2238, %v2411
      %v2500 = vadd.f32 %v2239, %v2416
      %v2501 = vadd.f32 %v2240, %v2419
      %v2502 = vadd.f32 %v2241, %v2424
      %v2503 = vadd.f32 %v2242, %v2427
      %v2504 = vadd.f32 %v2243, %v2432
      %v2505 = vadd.f32 %v2244, %v2435
      %v2506 = vadd.f32 %v2245, %v2440
      %v2507 = vadd.f32 %v2246, %v2443
      %v2508 = vadd.f32 %v2247, %v2448
      %v2509 = vadd.f32 %v2248, %v2451
      %v2510 = vadd.f32 %v2249, %v2456
      %v2511 = vadd.f32 %v2250, %v2459
      %v2512 = vadd.f32 %v2251, %v2464
      %v2513 = vadd.f32 %v2252, %v2467
      %v2514 = vadd.f32 %v2253, %v2472
      %v2515 = vadd.f32 %v2254, %v2475
      %v2516 = vadd.f32 %v2255, %v2480
      %v2517 = vadd.f32 %v2256, %v2483
      %s2518 = scalar_lea.vmem %s268, 448
      %v2519 = vld [vmem:[%s2518] sm:$0xf]
      %v2520 = vld [vmem:[%s2518 + $0x4] sm:$0xf]
      %v2521 = vld [vmem:[%s2518 + $0x8] sm:$0xf]
      %v2522 = vld [vmem:[%s2518 + $0xc] sm:$0xf]
      %v2523 = vld [vmem:[%s2518 + $0x10] sm:$0xf]
      %v2524 = vld [vmem:[%s2518 + $0x14] sm:$0xf]
      %v2525 = vld [vmem:[%s2518 + $0x18] sm:$0xf]
      %v2526 = vld [vmem:[%s2518 + $0x1c] sm:$0xf]
      %v2527 = vld [vmem:[%s2518 + $0x20] sm:$0xf]
      %v2528 = vld [vmem:[%s2518 + $0x24] sm:$0xf]
      %v2529 = vld [vmem:[%s2518 + $0x28] sm:$0xf]
      %v2530 = vld [vmem:[%s2518 + $0x2c] sm:$0xf]
      %v2531 = vld [vmem:[%s2518 + $0x30] sm:$0xf]
      %v2532 = vld [vmem:[%s2518 + $0x34] sm:$0xf]
      %v2533 = vld [vmem:[%s2518 + $0x38] sm:$0xf]
      %v2534 = vld [vmem:[%s2518 + $0x3c] sm:$0xf]
      %vm2535 = vsmask.f32 5376
      %v2536 = vrot.slane %v485, 2
      %v2537 = vrot.slane %v481, 3
      %v2538 = vor.u32 %v2536, %v2537
      %v2539 = vrot.slane %v493, 2
      %v2540 = vrot.slane %v489, 3
      %v2541 = vor.u32 %v2539, %v2540
      %v2542 = vsel %vm2535, %v2538, %v2541
      %v2543 = vrot.slane %v501, 2
      %v2544 = vrot.slane %v497, 3
      %v2545 = vor.u32 %v2543, %v2544
      %v2546 = vsel %vm2535, %v2541, %v2545
      %v2547 = vrot.slane %v509, 2
      %v2548 = vrot.slane %v505, 3
      %v2549 = vor.u32 %v2547, %v2548
      %v2550 = vsel %vm2535, %v2545, %v2549
      %v2551 = vrot.slane %v517, 2
      %v2552 = vrot.slane %v513, 3
      %v2553 = vor.u32 %v2551, %v2552
      %v2554 = vsel %vm2535, %v2549, %v2553
      %v2555 = vrot.slane %v525, 2
      %v2556 = vrot.slane %v521, 3
      %v2557 = vor.u32 %v2555, %v2556
      %v2558 = vsel %vm2535, %v2553, %v2557
      %v2559 = vrot.slane %v533, 2
      %v2560 = vrot.slane %v529, 3
      %v2561 = vor.u32 %v2559, %v2560
      %v2562 = vsel %vm2535, %v2557, %v2561
      %v2563 = vrot.slane %v541, 2
      %v2564 = vrot.slane %v537, 3
      %v2565 = vor.u32 %v2563, %v2564
      %v2566 = vsel %vm2535, %v2561, %v2565
      %v2567 = vrot.slane %v549, 2
      %v2568 = vrot.slane %v545, 3
      %v2569 = vor.u32 %v2567, %v2568
      %v2570 = vsel %vm2535, %v2565, %v2569
      %v2571 = vrot.slane %v557, 2
      %v2572 = vrot.slane %v553, 3
      %v2573 = vor.u32 %v2571, %v2572
      %v2574 = vsel %vm2535, %v2569, %v2573
      %v2575 = vrot.slane %v565, 2
      %v2576 = vrot.slane %v561, 3
      %v2577 = vor.u32 %v2575, %v2576
      %v2578 = vsel %vm2535, %v2573, %v2577
      %v2579 = vrot.slane %v573, 2
      %v2580 = vrot.slane %v569, 3
      %v2581 = vor.u32 %v2579, %v2580
      %v2582 = vsel %vm2535, %v2577, %v2581
      %v2583 = vrot.slane %v581, 2
      %v2584 = vrot.slane %v577, 3
      %v2585 = vor.u32 %v2583, %v2584
      %v2586 = vsel %vm2535, %v2581, %v2585
      %v2587 = vrot.slane %v589, 2
      %v2588 = vrot.slane %v585, 3
      %v2589 = vor.u32 %v2587, %v2588
      %v2590 = vsel %vm2535, %v2585, %v2589
      %v2591 = vrot.slane %v1677, 2
      %v2592 = vrot.slane %v593, 3
      %v2593 = vor.u32 %v2591, %v2592
      %v2594 = vsel %vm2535, %v2589, %v2593
      %v2595 = vrot.slane %v1684, 2
      %v2596 = vrot.slane %v1687, 3
      %v2597 = vor.u32 %v2595, %v2596
      %v2598 = vsel %vm2535, %v2593, %v2597
      %v2600 = vshrl.u32 %v430, 16
      %v2602 = vrot.slane %v2600, 2
      %v2603 = vshll.u32 %v430, 16
      %v2605 = vrot.slane %v2603, 3
      %v2606 = vor.u32 %v2602, %v2605
      %v2607 = vsel %vm2535, %v2597, %v2606
      %v2640 = vunpack.c.l.b16 %v2519
      %v2641 = vunpack.c.l.b16 %v2520
      %v2642 = vunpack.c.l.b16 %v2521
      %v2643 = vunpack.c.l.b16 %v2522
      %v2644 = vunpack.c.l.b16 %v2523
      %v2645 = vunpack.c.l.b16 %v2524
      %v2646 = vunpack.c.l.b16 %v2525
      %v2647 = vunpack.c.l.b16 %v2526
      %v2648 = vunpack.c.l.b16 %v2527
      %v2649 = vunpack.c.l.b16 %v2528
      %v2650 = vunpack.c.l.b16 %v2529
      %v2651 = vunpack.c.l.b16 %v2530
      %v2652 = vunpack.c.l.b16 %v2531
      %v2653 = vunpack.c.l.b16 %v2532
      %v2654 = vunpack.c.l.b16 %v2533
      %v2655 = vunpack.c.l.b16 %v2534
      %v2656 = vpack.c.b16 %v2641, %v2640
      %v2657 = vpack.c.b16 %v2643, %v2642
      %v2658 = vpack.c.b16 %v2645, %v2644
      %v2659 = vpack.c.b16 %v2647, %v2646
      %v2660 = vpack.c.b16 %v2649, %v2648
      %v2661 = vpack.c.b16 %v2651, %v2650
      %v2662 = vpack.c.b16 %v2653, %v2652
      %v2663 = vpack.c.b16 %v2655, %v2654
      %2672 = vmatprep.subr.bf16.mxu0 0
      %2673 = vmatpush1.bf16.msra.mxu0 %v2663
      %2674 = vmatprep.subr.bf16.mxu0 0
      %2675 = vmatpush1.bf16.msra.mxu0 %v2662
      %2676 = vmatprep.subr.bf16.mxu0 0
      %2677 = vmatpush1.bf16.msra.mxu0 %v2661
      %2678 = vmatprep.subr.bf16.mxu0 0
      %2679 = vmatpush1.bf16.msra.mxu0 %v2660
      %2680 = vmatprep.subr.bf16.mxu0 0
      %2681 = vmatpush1.bf16.msra.mxu0 %v2659
      %2682 = vmatprep.subr.bf16.mxu0 0
      %2683 = vmatpush1.bf16.msra.mxu0 %v2658
      %2684 = vmatprep.subr.bf16.mxu0 0
      %2685 = vmatpush1.bf16.msra.mxu0 %v2657
      %2686 = vmatprep.subr.bf16.mxu0 0
      %2687 = vmatpush1.bf16.msra.mxu0 %v2656
      %2688 = vmatprep.subr.bf16.mxu0 0
      %2689 = vmatpush2.bf16.msra.mxu0 0
      %2690 = vmatprep.subr.bf16.mxu0 0
      %2691 = vmatpush2.bf16.msra.mxu0 0
      %2692 = vmatprep.subr.bf16.mxu0 0
      %2693 = vmatpush2.bf16.msra.mxu0 0
      %2694 = vmatprep.subr.bf16.mxu0 0
      %2695 = vmatpush2.bf16.msra.mxu0 0
      %2696 = vmatprep.subr.bf16.mxu0 0
      %2697 = vmatpush2.bf16.msra.mxu0 0
      %2698 = vmatprep.subr.bf16.mxu0 0
      %2699 = vmatpush2.bf16.msra.mxu0 0
      %2700 = vmatprep.subr.bf16.mxu0 0
      %2701 = vmatpush2.bf16.msra.mxu0 0
      %2702 = vmatprep.subr.bf16.mxu0 0
      %2703 = vmatpush2.bf16.msra.mxu0 0
      %2704 = vmatprep.mubr.bf16.mxu0 0
      %2705 = vmatmul.mubr.bf16.gmra.mxu0 %v2542
      %v2706 = vpop.f32.mrf.mxu0
      %v2707 = vadd.f32 0.0, %v2706
      %v2708 = vpop.f32.mrf.mxu0
      %v2709 = vpop.f32.mrf.mxu0
      %v2710 = vadd.f32 0.0, %v2709
      %v2711 = vpop.f32.mrf.mxu0
      %2712 = vmatprep.mubr.bf16.mxu0 0
      %2713 = vmatmul.mubr.bf16.gmra.mxu0 %v2546
      %v2714 = vpop.f32.mrf.mxu0
      %v2715 = vadd.f32 0.0, %v2714
      %v2716 = vpop.f32.mrf.mxu0
      %v2717 = vpop.f32.mrf.mxu0
      %v2718 = vadd.f32 0.0, %v2717
      %v2719 = vpop.f32.mrf.mxu0
      %2720 = vmatprep.mubr.bf16.mxu0 0
      %2721 = vmatmul.mubr.bf16.gmra.mxu0 %v2550
      %v2722 = vpop.f32.mrf.mxu0
      %v2723 = vadd.f32 0.0, %v2722
      %v2724 = vpop.f32.mrf.mxu0
      %v2725 = vpop.f32.mrf.mxu0
      %v2726 = vadd.f32 0.0, %v2725
      %v2727 = vpop.f32.mrf.mxu0
      %2728 = vmatprep.mubr.bf16.mxu0 0
      %2729 = vmatmul.mubr.bf16.gmra.mxu0 %v2554
      %v2730 = vpop.f32.mrf.mxu0
      %v2731 = vadd.f32 0.0, %v2730
      %v2732 = vpop.f32.mrf.mxu0
      %v2733 = vpop.f32.mrf.mxu0
      %v2734 = vadd.f32 0.0, %v2733
      %v2735 = vpop.f32.mrf.mxu0
      %2736 = vmatprep.mubr.bf16.mxu0 0
      %2737 = vmatmul.mubr.bf16.gmra.mxu0 %v2558
      %v2738 = vpop.f32.mrf.mxu0
      %v2739 = vadd.f32 0.0, %v2738
      %v2740 = vpop.f32.mrf.mxu0
      %v2741 = vpop.f32.mrf.mxu0
      %v2742 = vadd.f32 0.0, %v2741
      %v2743 = vpop.f32.mrf.mxu0
      %2744 = vmatprep.mubr.bf16.mxu0 0
      %2745 = vmatmul.mubr.bf16.gmra.mxu0 %v2562
      %v2746 = vpop.f32.mrf.mxu0
      %v2747 = vadd.f32 0.0, %v2746
      %v2748 = vpop.f32.mrf.mxu0
      %v2749 = vpop.f32.mrf.mxu0
      %v2750 = vadd.f32 0.0, %v2749
      %v2751 = vpop.f32.mrf.mxu0
      %2752 = vmatprep.mubr.bf16.mxu0 0
      %2753 = vmatmul.mubr.bf16.gmra.mxu0 %v2566
      %v2754 = vpop.f32.mrf.mxu0
      %v2755 = vadd.f32 0.0, %v2754
      %v2756 = vpop.f32.mrf.mxu0
      %v2757 = vpop.f32.mrf.mxu0
      %v2758 = vadd.f32 0.0, %v2757
      %v2759 = vpop.f32.mrf.mxu0
      %2760 = vmatprep.mubr.bf16.mxu0 0
      %2761 = vmatmul.mubr.bf16.gmra.mxu0 %v2570
      %v2762 = vpop.f32.mrf.mxu0
      %v2763 = vadd.f32 0.0, %v2762
      %v2764 = vpop.f32.mrf.mxu0
      %v2765 = vpop.f32.mrf.mxu0
      %v2766 = vadd.f32 0.0, %v2765
      %v2767 = vpop.f32.mrf.mxu0
      %2768 = vmatprep.mubr.bf16.mxu0 0
      %2769 = vmatmul.mubr.bf16.gmra.mxu0 %v2574
      %v2770 = vpop.f32.mrf.mxu0
      %v2771 = vadd.f32 0.0, %v2770
      %v2772 = vpop.f32.mrf.mxu0
      %v2773 = vpop.f32.mrf.mxu0
      %v2774 = vadd.f32 0.0, %v2773
      %v2775 = vpop.f32.mrf.mxu0
      %2776 = vmatprep.mubr.bf16.mxu0 0
      %2777 = vmatmul.mubr.bf16.gmra.mxu0 %v2578
      %v2778 = vpop.f32.mrf.mxu0
      %v2779 = vadd.f32 0.0, %v2778
      %v2780 = vpop.f32.mrf.mxu0
      %v2781 = vpop.f32.mrf.mxu0
      %v2782 = vadd.f32 0.0, %v2781
      %v2783 = vpop.f32.mrf.mxu0
      %2784 = vmatprep.mubr.bf16.mxu0 0
      %2785 = vmatmul.mubr.bf16.gmra.mxu0 %v2582
      %v2786 = vpop.f32.mrf.mxu0
      %v2787 = vadd.f32 0.0, %v2786
      %v2788 = vpop.f32.mrf.mxu0
      %v2789 = vpop.f32.mrf.mxu0
      %v2790 = vadd.f32 0.0, %v2789
      %v2791 = vpop.f32.mrf.mxu0
      %2792 = vmatprep.mubr.bf16.mxu0 0
      %2793 = vmatmul.mubr.bf16.gmra.mxu0 %v2586
      %v2794 = vpop.f32.mrf.mxu0
      %v2795 = vadd.f32 0.0, %v2794
      %v2796 = vpop.f32.mrf.mxu0
      %v2797 = vpop.f32.mrf.mxu0
      %v2798 = vadd.f32 0.0, %v2797
      %v2799 = vpop.f32.mrf.mxu0
      %2800 = vmatprep.mubr.bf16.mxu0 0
      %2801 = vmatmul.mubr.bf16.gmra.mxu0 %v2590
      %v2802 = vpop.f32.mrf.mxu0
      %v2803 = vadd.f32 0.0, %v2802
      %v2804 = vpop.f32.mrf.mxu0
      %v2805 = vpop.f32.mrf.mxu0
      %v2806 = vadd.f32 0.0, %v2805
      %v2807 = vpop.f32.mrf.mxu0
      %2808 = vmatprep.mubr.bf16.mxu0 0
      %2809 = vmatmul.mubr.bf16.gmra.mxu0 %v2594
      %v2810 = vpop.f32.mrf.mxu0
      %v2811 = vadd.f32 0.0, %v2810
      %v2812 = vpop.f32.mrf.mxu0
      %v2813 = vpop.f32.mrf.mxu0
      %v2814 = vadd.f32 0.0, %v2813
      %v2815 = vpop.f32.mrf.mxu0
      %2816 = vmatprep.mubr.bf16.mxu0 0
      %2817 = vmatmul.mubr.bf16.gmra.mxu0 %v2598
      %v2818 = vpop.f32.mrf.mxu0
      %v2819 = vadd.f32 0.0, %v2818
      %v2820 = vpop.f32.mrf.mxu0
      %v2821 = vpop.f32.mrf.mxu0
      %v2822 = vadd.f32 0.0, %v2821
      %v2823 = vpop.f32.mrf.mxu0
      %2824 = vmatprep.mubr.bf16.mxu0 0
      %2825 = vmatmul.mubr.bf16.gmra.mxu0 %v2607
      %v2826 = vpop.f32.mrf.mxu0
      %v2827 = vadd.f32 0.0, %v2826
      %v2828 = vpop.f32.mrf.mxu0
      %v2829 = vpop.f32.mrf.mxu0
      %v2830 = vadd.f32 0.0, %v2829
      %v2831 = vpop.f32.mrf.mxu0
      %2832 = vdwg.mxu0
      %v2833 = vadd.f32 %v2486, %v2707
      %v2834 = vadd.f32 %v2487, %v2710
      %v2835 = vadd.f32 %v2488, %v2715
      %v2836 = vadd.f32 %v2489, %v2718
      %v2837 = vadd.f32 %v2490, %v2723
      %v2838 = vadd.f32 %v2491, %v2726
      %v2839 = vadd.f32 %v2492, %v2731
      %v2840 = vadd.f32 %v2493, %v2734
      %v2841 = vadd.f32 %v2494, %v2739
      %v2842 = vadd.f32 %v2495, %v2742
      %v2843 = vadd.f32 %v2496, %v2747
      %v2844 = vadd.f32 %v2497, %v2750
      %v2845 = vadd.f32 %v2498, %v2755
      %v2846 = vadd.f32 %v2499, %v2758
      %v2847 = vadd.f32 %v2500, %v2763
      %v2848 = vadd.f32 %v2501, %v2766
      %v2849 = vadd.f32 %v2502, %v2771
      %v2850 = vadd.f32 %v2503, %v2774
      %v2851 = vadd.f32 %v2504, %v2779
      %v2852 = vadd.f32 %v2505, %v2782
      %v2853 = vadd.f32 %v2506, %v2787
      %v2854 = vadd.f32 %v2507, %v2790
      %v2855 = vadd.f32 %v2508, %v2795
      %v2856 = vadd.f32 %v2509, %v2798
      %v2857 = vadd.f32 %v2510, %v2803
      %v2858 = vadd.f32 %v2511, %v2806
      %v2859 = vadd.f32 %v2512, %v2811
      %v2860 = vadd.f32 %v2513, %v2814
      %v2861 = vadd.f32 %v2514, %v2819
      %v2862 = vadd.f32 %v2515, %v2822
      %v2863 = vadd.f32 %v2516, %v2827
      %v2864 = vadd.f32 %v2517, %v2830
      %s2865 = scalar_lea.vmem %s268, 512
      %v2866 = vld [vmem:[%s2865] sm:$0xf]
      %v2867 = vld [vmem:[%s2865 + $0x4] sm:$0xf]
      %v2868 = vld [vmem:[%s2865 + $0x8] sm:$0xf]
      %v2869 = vld [vmem:[%s2865 + $0xc] sm:$0xf]
      %v2870 = vld [vmem:[%s2865 + $0x10] sm:$0xf]
      %v2871 = vld [vmem:[%s2865 + $0x14] sm:$0xf]
      %v2872 = vld [vmem:[%s2865 + $0x18] sm:$0xf]
      %v2873 = vld [vmem:[%s2865 + $0x1c] sm:$0xf]
      %v2874 = vld [vmem:[%s2865 + $0x20] sm:$0xf]
      %v2875 = vld [vmem:[%s2865 + $0x24] sm:$0xf]
      %v2876 = vld [vmem:[%s2865 + $0x28] sm:$0xf]
      %v2877 = vld [vmem:[%s2865 + $0x2c] sm:$0xf]
      %v2878 = vld [vmem:[%s2865 + $0x30] sm:$0xf]
      %v2879 = vld [vmem:[%s2865 + $0x34] sm:$0xf]
      %v2880 = vld [vmem:[%s2865 + $0x38] sm:$0xf]
      %v2881 = vld [vmem:[%s2865 + $0x3c] sm:$0xf]
      %vm2882 = vcmask 1044480
      %v2883 = vrot.slane %v386, 3
      %v2884 = vrot.slane %v387, 3
      %v2885 = vsel %vm2882, %v2883, %v2884
      %v2886 = vrot.slane %v388, 3
      %v2887 = vsel %vm2882, %v2884, %v2886
      %v2888 = vrot.slane %v389, 3
      %v2889 = vsel %vm2882, %v2886, %v2888
      %v2890 = vrot.slane %v390, 3
      %v2891 = vsel %vm2882, %v2888, %v2890
      %v2892 = vrot.slane %v391, 3
      %v2893 = vsel %vm2882, %v2890, %v2892
      %v2894 = vrot.slane %v392, 3
      %v2895 = vsel %vm2882, %v2892, %v2894
      %v2896 = vrot.slane %v393, 3
      %v2897 = vsel %vm2882, %v2894, %v2896
      %v2898 = vrot.slane %v394, 3
      %v2899 = vsel %vm2882, %v2896, %v2898
      %v2900 = vrot.slane %v395, 3
      %v2901 = vsel %vm2882, %v2898, %v2900
      %v2902 = vrot.slane %v396, 3
      %v2903 = vsel %vm2882, %v2900, %v2902
      %v2904 = vrot.slane %v397, 3
      %v2905 = vsel %vm2882, %v2902, %v2904
      %v2906 = vrot.slane %v398, 3
      %v2907 = vsel %vm2882, %v2904, %v2906
      %v2908 = vrot.slane %v399, 3
      %v2909 = vsel %vm2882, %v2906, %v2908
      %v2910 = vrot.slane %v428, 3
      %v2911 = vsel %vm2882, %v2908, %v2910
      %v2912 = vrot.slane %v429, 3
      %v2913 = vsel %vm2882, %v2910, %v2912
      %v2914 = vrot.slane %v430, 3
      %v2915 = vsel %vm2882, %v2912, %v2914
      %v2948 = vunpack.c.l.b16 %v2866
      %v2949 = vunpack.c.l.b16 %v2867
      %v2950 = vunpack.c.l.b16 %v2868
      %v2951 = vunpack.c.l.b16 %v2869
      %v2952 = vunpack.c.l.b16 %v2870
      %v2953 = vunpack.c.l.b16 %v2871
      %v2954 = vunpack.c.l.b16 %v2872
      %v2955 = vunpack.c.l.b16 %v2873
      %v2956 = vunpack.c.l.b16 %v2874
      %v2957 = vunpack.c.l.b16 %v2875
      %v2958 = vunpack.c.l.b16 %v2876
      %v2959 = vunpack.c.l.b16 %v2877
      %v2960 = vunpack.c.l.b16 %v2878
      %v2961 = vunpack.c.l.b16 %v2879
      %v2962 = vunpack.c.l.b16 %v2880
      %v2963 = vunpack.c.l.b16 %v2881
      %v2964 = vpack.c.b16 %v2949, %v2948
      %v2965 = vpack.c.b16 %v2951, %v2950
      %v2966 = vpack.c.b16 %v2953, %v2952
      %v2967 = vpack.c.b16 %v2955, %v2954
      %v2968 = vpack.c.b16 %v2957, %v2956
      %v2969 = vpack.c.b16 %v2959, %v2958
      %v2970 = vpack.c.b16 %v2961, %v2960
      %v2971 = vpack.c.b16 %v2963, %v2962
      %2980 = vmatprep.subr.bf16.mxu0 0
      %2981 = vmatpush1.bf16.msra.mxu0 %v2971
      %2982 = vmatprep.subr.bf16.mxu0 0
      %2983 = vmatpush1.bf16.msra.mxu0 %v2970
      %2984 = vmatprep.subr.bf16.mxu0 0
      %2985 = vmatpush1.bf16.msra.mxu0 %v2969
      %2986 = vmatprep.subr.bf16.mxu0 0
      %2987 = vmatpush1.bf16.msra.mxu0 %v2968
      %2988 = vmatprep.subr.bf16.mxu0 0
      %2989 = vmatpush1.bf16.msra.mxu0 %v2967
      %2990 = vmatprep.subr.bf16.mxu0 0
      %2991 = vmatpush1.bf16.msra.mxu0 %v2966
      %2992 = vmatprep.subr.bf16.mxu0 0
      %2993 = vmatpush1.bf16.msra.mxu0 %v2965
      %2994 = vmatprep.subr.bf16.mxu0 0
      %2995 = vmatpush1.bf16.msra.mxu0 %v2964
      %2996 = vmatprep.subr.bf16.mxu0 0
      %2997 = vmatpush2.bf16.msra.mxu0 0
      %2998 = vmatprep.subr.bf16.mxu0 0
      %2999 = vmatpush2.bf16.msra.mxu0 0
      %3000 = vmatprep.subr.bf16.mxu0 0
      %3001 = vmatpush2.bf16.msra.mxu0 0
      %3002 = vmatprep.subr.bf16.mxu0 0
      %3003 = vmatpush2.bf16.msra.mxu0 0
      %3004 = vmatprep.subr.bf16.mxu0 0
      %3005 = vmatpush2.bf16.msra.mxu0 0
      %3006 = vmatprep.subr.bf16.mxu0 0
      %3007 = vmatpush2.bf16.msra.mxu0 0
      %3008 = vmatprep.subr.bf16.mxu0 0
      %3009 = vmatpush2.bf16.msra.mxu0 0
      %3010 = vmatprep.subr.bf16.mxu0 0
      %3011 = vmatpush2.bf16.msra.mxu0 0
      %3012 = vmatprep.mubr.bf16.mxu0 0
      %3013 = vmatmul.mubr.bf16.gmra.mxu0 %v2885
      %v3014 = vpop.f32.mrf.mxu0
      %v3015 = vadd.f32 0.0, %v3014
      %v3016 = vpop.f32.mrf.mxu0
      %v3017 = vpop.f32.mrf.mxu0
      %v3018 = vadd.f32 0.0, %v3017
      %v3019 = vpop.f32.mrf.mxu0
      %3020 = vmatprep.mubr.bf16.mxu0 0
      %3021 = vmatmul.mubr.bf16.gmra.mxu0 %v2887
      %v3022 = vpop.f32.mrf.mxu0
      %v3023 = vadd.f32 0.0, %v3022
      %v3024 = vpop.f32.mrf.mxu0
      %v3025 = vpop.f32.mrf.mxu0
      %v3026 = vadd.f32 0.0, %v3025
      %v3027 = vpop.f32.mrf.mxu0
      %3028 = vmatprep.mubr.bf16.mxu0 0
      %3029 = vmatmul.mubr.bf16.gmra.mxu0 %v2889
      %v3030 = vpop.f32.mrf.mxu0
      %v3031 = vadd.f32 0.0, %v3030
      %v3032 = vpop.f32.mrf.mxu0
      %v3033 = vpop.f32.mrf.mxu0
      %v3034 = vadd.f32 0.0, %v3033
      %v3035 = vpop.f32.mrf.mxu0
      %3036 = vmatprep.mubr.bf16.mxu0 0
      %3037 = vmatmul.mubr.bf16.gmra.mxu0 %v2891
      %v3038 = vpop.f32.mrf.mxu0
      %v3039 = vadd.f32 0.0, %v3038
      %v3040 = vpop.f32.mrf.mxu0
      %v3041 = vpop.f32.mrf.mxu0
      %v3042 = vadd.f32 0.0, %v3041
      %v3043 = vpop.f32.mrf.mxu0
      %3044 = vmatprep.mubr.bf16.mxu0 0
      %3045 = vmatmul.mubr.bf16.gmra.mxu0 %v2893
      %v3046 = vpop.f32.mrf.mxu0
      %v3047 = vadd.f32 0.0, %v3046
      %v3048 = vpop.f32.mrf.mxu0
      %v3049 = vpop.f32.mrf.mxu0
      %v3050 = vadd.f32 0.0, %v3049
      %v3051 = vpop.f32.mrf.mxu0
      %3052 = vmatprep.mubr.bf16.mxu0 0
      %3053 = vmatmul.mubr.bf16.gmra.mxu0 %v2895
      %v3054 = vpop.f32.mrf.mxu0
      %v3055 = vadd.f32 0.0, %v3054
      %v3056 = vpop.f32.mrf.mxu0
      %v3057 = vpop.f32.mrf.mxu0
      %v3058 = vadd.f32 0.0, %v3057
      %v3059 = vpop.f32.mrf.mxu0
      %3060 = vmatprep.mubr.bf16.mxu0 0
      %3061 = vmatmul.mubr.bf16.gmra.mxu0 %v2897
      %v3062 = vpop.f32.mrf.mxu0
      %v3063 = vadd.f32 0.0, %v3062
      %v3064 = vpop.f32.mrf.mxu0
      %v3065 = vpop.f32.mrf.mxu0
      %v3066 = vadd.f32 0.0, %v3065
      %v3067 = vpop.f32.mrf.mxu0
      %3068 = vmatprep.mubr.bf16.mxu0 0
      %3069 = vmatmul.mubr.bf16.gmra.mxu0 %v2899
      %v3070 = vpop.f32.mrf.mxu0
      %v3071 = vadd.f32 0.0, %v3070
      %v3072 = vpop.f32.mrf.mxu0
      %v3073 = vpop.f32.mrf.mxu0
      %v3074 = vadd.f32 0.0, %v3073
      %v3075 = vpop.f32.mrf.mxu0
      %3076 = vmatprep.mubr.bf16.mxu0 0
      %3077 = vmatmul.mubr.bf16.gmra.mxu0 %v2901
      %v3078 = vpop.f32.mrf.mxu0
      %v3079 = vadd.f32 0.0, %v3078
      %v3080 = vpop.f32.mrf.mxu0
      %v3081 = vpop.f32.mrf.mxu0
      %v3082 = vadd.f32 0.0, %v3081
      %v3083 = vpop.f32.mrf.mxu0
      %3084 = vmatprep.mubr.bf16.mxu0 0
      %3085 = vmatmul.mubr.bf16.gmra.mxu0 %v2903
      %v3086 = vpop.f32.mrf.mxu0
      %v3087 = vadd.f32 0.0, %v3086
      %v3088 = vpop.f32.mrf.mxu0
      %v3089 = vpop.f32.mrf.mxu0
      %v3090 = vadd.f32 0.0, %v3089
      %v3091 = vpop.f32.mrf.mxu0
      %3092 = vmatprep.mubr.bf16.mxu0 0
      %3093 = vmatmul.mubr.bf16.gmra.mxu0 %v2905
      %v3094 = vpop.f32.mrf.mxu0
      %v3095 = vadd.f32 0.0, %v3094
      %v3096 = vpop.f32.mrf.mxu0
      %v3097 = vpop.f32.mrf.mxu0
      %v3098 = vadd.f32 0.0, %v3097
      %v3099 = vpop.f32.mrf.mxu0
      %3100 = vmatprep.mubr.bf16.mxu0 0
      %3101 = vmatmul.mubr.bf16.gmra.mxu0 %v2907
      %v3102 = vpop.f32.mrf.mxu0
      %v3103 = vadd.f32 0.0, %v3102
      %v3104 = vpop.f32.mrf.mxu0
      %v3105 = vpop.f32.mrf.mxu0
      %v3106 = vadd.f32 0.0, %v3105
      %v3107 = vpop.f32.mrf.mxu0
      %3108 = vmatprep.mubr.bf16.mxu0 0
      %3109 = vmatmul.mubr.bf16.gmra.mxu0 %v2909
      %v3110 = vpop.f32.mrf.mxu0
      %v3111 = vadd.f32 0.0, %v3110
      %v3112 = vpop.f32.mrf.mxu0
      %v3113 = vpop.f32.mrf.mxu0
      %v3114 = vadd.f32 0.0, %v3113
      %v3115 = vpop.f32.mrf.mxu0
      %3116 = vmatprep.mubr.bf16.mxu0 0
      %3117 = vmatmul.mubr.bf16.gmra.mxu0 %v2911
      %v3118 = vpop.f32.mrf.mxu0
      %v3119 = vadd.f32 0.0, %v3118
      %v3120 = vpop.f32.mrf.mxu0
      %v3121 = vpop.f32.mrf.mxu0
      %v3122 = vadd.f32 0.0, %v3121
      %v3123 = vpop.f32.mrf.mxu0
      %3124 = vmatprep.mubr.bf16.mxu0 0
      %3125 = vmatmul.mubr.bf16.gmra.mxu0 %v2913
      %v3126 = vpop.f32.mrf.mxu0
      %v3127 = vadd.f32 0.0, %v3126
      %v3128 = vpop.f32.mrf.mxu0
      %v3129 = vpop.f32.mrf.mxu0
      %v3130 = vadd.f32 0.0, %v3129
      %v3131 = vpop.f32.mrf.mxu0
      %3132 = vmatprep.mubr.bf16.mxu0 0
      %3133 = vmatmul.mubr.bf16.gmra.mxu0 %v2915
      %v3134 = vpop.f32.mrf.mxu0
      %v3135 = vadd.f32 0.0, %v3134
      %v3136 = vpop.f32.mrf.mxu0
      %v3137 = vpop.f32.mrf.mxu0
      %v3138 = vadd.f32 0.0, %v3137
      %v3139 = vpop.f32.mrf.mxu0
      %3140 = vdwg.mxu0
      %v3141 = vadd.f32 %v2833, %v3015
      %v3142 = vadd.f32 %v2834, %v3018
      %v3143 = vadd.f32 %v2835, %v3023
      %v3144 = vadd.f32 %v2836, %v3026
      %v3145 = vadd.f32 %v2837, %v3031
      %v3146 = vadd.f32 %v2838, %v3034
      %v3147 = vadd.f32 %v2839, %v3039
      %v3148 = vadd.f32 %v2840, %v3042
      %v3149 = vadd.f32 %v2841, %v3047
      %v3150 = vadd.f32 %v2842, %v3050
      %v3151 = vadd.f32 %v2843, %v3055
      %v3152 = vadd.f32 %v2844, %v3058
      %v3153 = vadd.f32 %v2845, %v3063
      %v3154 = vadd.f32 %v2846, %v3066
      %v3155 = vadd.f32 %v2847, %v3071
      %v3156 = vadd.f32 %v2848, %v3074
      %v3157 = vadd.f32 %v2849, %v3079
      %v3158 = vadd.f32 %v2850, %v3082
      %v3159 = vadd.f32 %v2851, %v3087
      %v3160 = vadd.f32 %v2852, %v3090
      %v3161 = vadd.f32 %v2853, %v3095
      %v3162 = vadd.f32 %v2854, %v3098
      %v3163 = vadd.f32 %v2855, %v3103
      %v3164 = vadd.f32 %v2856, %v3106
      %v3165 = vadd.f32 %v2857, %v3111
      %v3166 = vadd.f32 %v2858, %v3114
      %v3167 = vadd.f32 %v2859, %v3119
      %v3168 = vadd.f32 %v2860, %v3122
      %v3169 = vadd.f32 %v2861, %v3127
      %v3170 = vadd.f32 %v2862, %v3130
      %v3171 = vadd.f32 %v2863, %v3135
      %v3172 = vadd.f32 %v2864, %v3138
      %v3173 = vld [vmem:[%s271] sm:$0x1]
      %v3175 = vlaneseq
      %v3176 = vshrl.u32 %v3175, 7
      %v3177 = vsub.s32 0, %v3176
      %v3178 = vrot.slane %v3173, %v3177
      %v3180 = vadd.f32 %v3141, %v3178
      %v3181 = vadd.f32 %v3142, %v3178
      %v3182 = vadd.f32 %v3143, %v3178
      %v3183 = vadd.f32 %v3144, %v3178
      %v3184 = vadd.f32 %v3145, %v3178
      %v3185 = vadd.f32 %v3146, %v3178
      %v3186 = vadd.f32 %v3147, %v3178
      %v3187 = vadd.f32 %v3148, %v3178
      %v3188 = vadd.f32 %v3149, %v3178
      %v3189 = vadd.f32 %v3150, %v3178
      %v3190 = vadd.f32 %v3151, %v3178
      %v3191 = vadd.f32 %v3152, %v3178
      %v3192 = vadd.f32 %v3153, %v3178
      %v3193 = vadd.f32 %v3154, %v3178
      %v3194 = vadd.f32 %v3155, %v3178
      %v3195 = vadd.f32 %v3156, %v3178
      %v3196 = vadd.f32 %v3157, %v3178
      %v3197 = vadd.f32 %v3158, %v3178
      %v3198 = vadd.f32 %v3159, %v3178
      %v3199 = vadd.f32 %v3160, %v3178
      %v3200 = vadd.f32 %v3161, %v3178
      %v3201 = vadd.f32 %v3162, %v3178
      %v3202 = vadd.f32 %v3163, %v3178
      %v3203 = vadd.f32 %v3164, %v3178
      %v3204 = vadd.f32 %v3165, %v3178
      %v3205 = vadd.f32 %v3166, %v3178
      %v3206 = vadd.f32 %v3167, %v3178
      %v3207 = vadd.f32 %v3168, %v3178
      %v3208 = vadd.f32 %v3169, %v3178
      %v3209 = vadd.f32 %v3170, %v3178
      %v3210 = vadd.f32 %v3171, %v3178
      %v3211 = vadd.f32 %v3172, %v3178
      %v3212 = vmax.f32 %v3180, 0.0
      %v3213 = vmax.f32 %v3181, 0.0
      %v3214 = vmax.f32 %v3182, 0.0
      %v3215 = vmax.f32 %v3183, 0.0
      %v3216 = vmax.f32 %v3184, 0.0
      %v3217 = vmax.f32 %v3185, 0.0
      %v3218 = vmax.f32 %v3186, 0.0
      %v3219 = vmax.f32 %v3187, 0.0
      %v3220 = vmax.f32 %v3188, 0.0
      %v3221 = vmax.f32 %v3189, 0.0
      %v3222 = vmax.f32 %v3190, 0.0
      %v3223 = vmax.f32 %v3191, 0.0
      %v3224 = vmax.f32 %v3192, 0.0
      %v3225 = vmax.f32 %v3193, 0.0
      %v3226 = vmax.f32 %v3194, 0.0
      %v3227 = vmax.f32 %v3195, 0.0
      %v3228 = vmax.f32 %v3196, 0.0
      %v3229 = vmax.f32 %v3197, 0.0
      %v3230 = vmax.f32 %v3198, 0.0
      %v3231 = vmax.f32 %v3199, 0.0
      %v3232 = vmax.f32 %v3200, 0.0
      %v3233 = vmax.f32 %v3201, 0.0
      %v3234 = vmax.f32 %v3202, 0.0
      %v3235 = vmax.f32 %v3203, 0.0
      %v3236 = vmax.f32 %v3204, 0.0
      %v3237 = vmax.f32 %v3205, 0.0
      %v3238 = vmax.f32 %v3206, 0.0
      %v3239 = vmax.f32 %v3207, 0.0
      %v3240 = vmax.f32 %v3208, 0.0
      %v3241 = vmax.f32 %v3209, 0.0
      %v3242 = vmax.f32 %v3210, 0.0
      %v3243 = vmax.f32 %v3211, 0.0
      %3244 = vst [vmem:[%s279] sm:$0xff] %v3212
      %3245 = vst [vmem:[%s279 + $0x8] sm:$0xff] %v3213
      %3246 = vst [vmem:[%s279 + $0x10] sm:$0xff] %v3214
      %3247 = vst [vmem:[%s279 + $0x18] sm:$0xff] %v3215
      %3248 = vst [vmem:[%s279 + $0x20] sm:$0xff] %v3216
      %3249 = vst [vmem:[%s279 + $0x28] sm:$0xff] %v3217
      %3250 = vst [vmem:[%s279 + $0x30] sm:$0xff] %v3218
      %3251 = vst [vmem:[%s279 + $0x38] sm:$0xff] %v3219
      %3252 = vst [vmem:[%s279 + $0x40] sm:$0xff] %v3220
      %3253 = vst [vmem:[%s279 + $0x48] sm:$0xff] %v3221
      %3254 = vst [vmem:[%s279 + $0x50] sm:$0xff] %v3222
      %3255 = vst [vmem:[%s279 + $0x58] sm:$0xff] %v3223
      %3256 = vst [vmem:[%s279 + $0x60] sm:$0xff] %v3224
      %3257 = vst [vmem:[%s279 + $0x68] sm:$0xff] %v3225
      %3258 = vst [vmem:[%s279 + $0x70] sm:$0xff] %v3226
      %3259 = vst [vmem:[%s279 + $0x78] sm:$0xff] %v3227
      %3260 = vst [vmem:[%s279 + $0x80] sm:$0xff] %v3228
      %3261 = vst [vmem:[%s279 + $0x88] sm:$0xff] %v3229
      %3262 = vst [vmem:[%s279 + $0x90] sm:$0xff] %v3230
      %3263 = vst [vmem:[%s279 + $0x98] sm:$0xff] %v3231
      %3264 = vst [vmem:[%s279 + $0xa0] sm:$0xff] %v3232
      %3265 = vst [vmem:[%s279 + $0xa8] sm:$0xff] %v3233
      %3266 = vst [vmem:[%s279 + $0xb0] sm:$0xff] %v3234
      %3267 = vst [vmem:[%s279 + $0xb8] sm:$0xff] %v3235
      %3268 = vst [vmem:[%s279 + $0xc0] sm:$0xff] %v3236
      %3269 = vst [vmem:[%s279 + $0xc8] sm:$0xff] %v3237
      %3270 = vst [vmem:[%s279 + $0xd0] sm:$0xff] %v3238
      %3271 = vst [vmem:[%s279 + $0xd8] sm:$0xff] %v3239
      %3272 = vst [vmem:[%s279 + $0xe0] sm:$0xff] %v3240
      %3273 = vst [vmem:[%s279 + $0xe8] sm:$0xff] %v3241
      %3274 = vst [vmem:[%s279 + $0xf0] sm:$0xff] %v3242
      %3275 = vst [vmem:[%s279 + $0xf8] sm:$0xff] %v3243
      %s3276 = smul.u32 32, %s20
      %p3277 = scmp.lt.s32.totalorder %s3276, 95
      %s3278 = scalar_select %p3277, %s3276, 95
      %p3279 = scmp.lt.s32.totalorder %s19, 0
      %s3280 = scalar_select %p3279, %s19, 0
      %s3281 = sadd.s32 %s3280, %s3278
      %s3282 = smul.addr %s3281, 8
      %s3283 = scalar_lea.vmem %s4, %s3282
      // Predicated region
      $region37: #{basic_conv2d.1} parent=35 // pred_check
        %p3284 = pneg %p153
      $region38: #{basic_conv2d.1} parent=35 // pred_check_branch
        %3286 = sbr.rel (%p3284) target = $region40
      $region39: #{basic_conv2d.1} parent=35 // pred_region
        %s3287 = smul.u32 32, %s20
      $region40: #{basic_conv2d.1} parent=35 // pred_fallthru
        _
    $region36: #{basic_conv2d.1} parent=5 // pred_fallthru
      _
    %p3288 = scmp.le.s32.totalorder 2, %s10
    // Predicated region
    $region41: #{basic_conv2d.1} parent=5 // pred_check
      %p3289 = pneg %p3288
    $region42: #{basic_conv2d.1} parent=5 // pred_check_branch
      %3291 = sbr.rel (%p3289) target = $region44
    $region43: #{basic_conv2d.1} parent=5 // pred_region
      %s3292 = ssub.s32 %s10, 2
      // Predicated region
      $region45: #{basic_conv2d.1} parent=43 // pred_check
        %p3293 = pneg %p159
      $region46: #{basic_conv2d.1} parent=43 // pred_check_branch
        %3295 = sbr.rel (%p3293) target = $region48
      $region47: #{basic_conv2d.1} parent=43 // pred_region
        %s3296 = smul.u32 32, %s22
        %p3297 = scmp.lt.s32.totalorder %s3296, 95
        %s3298 = scalar_select %p3297, %s3296, 95
        %p3299 = scmp.lt.s32.totalorder %s21, 0
        %s3300 = scalar_select %p3299, %s21, 0
        %s3301 = sadd.s32 %s3300, %s3298
        %s3302 = smul.addr %s3301, 8
        %s3303 = scalar_lea.vmem %s4, %s3302
      $region48: #{basic_conv2d.1} parent=43 // pred_fallthru
        _
    $region44: #{basic_conv2d.1} parent=5 // pred_fallthru
      _
  $region6: #{basic_conv2d.1} parent=0 // loop_footer
    %s14 = sadd.s32 1, %s10
  $region7: #{basic_conv2d.1} parent=0 // loop_footer_branch
    %9 = sbr.rel target = $region3
  $region8: #{basic_conv2d.1} parent=0 // loop_exit
    _

</llo_original>
